<compile_context>
chip_gen: v6e
topology: v6e:2x2x1
jax: 0.10.0
libtpu: 0.0.40
codegen_flags: <defaults>
</compile_context>

<pallas_src>
import jax
import jax.numpy as jnp
from jax import lax
from jax.experimental import pallas as pl
from jax.experimental.pallas import tpu as pltpu

BOARD = 19
HW = BOARD * BOARD          # 361 true spatial size
HW_PAD = 384                # 3 * 128 -> lane-aligned per-sample width
OUT_DIM = HW + 1            # 362
OUT_PAD = 384               # 3 * 128 -> lane-dense output
BN_EPS = 1e-5


def _policy_head_kernel(x_ref, wc_ref, gamma_ref, beta_ref, wfc_ref, bfc_ref,
                        out_ref):
    # x_ref:     (C_in, N*HW_PAD)      bf16  column = n*HW_PAD + hw, zero padded
    # wc_ref:    (C, C_in)             bf16  1x1 conv weight (bias dropped: it
    #                                        is cancelled by training-mode BN)
    # gamma_ref: (C, 1)                f32   BN gamma
    # beta_ref:  (C, 1)                f32   BN beta
    # wfc_ref:   (C, HW_PAD, OUT_PAD)  bf16  FC weight; padded K rows / out
    #                                        columns are zero
    # bfc_ref:   (1, OUT_PAD)          f32   FC bias (zeros in padding)
    # out_ref:   (N, OUT_PAD)          f32
    N = out_ref.shape[0]
    C = wc_ref.shape[0]

    # ---- 1x1 conv over the whole batch: one MXU matmul, f32 accumulation ----
    # Padded columns of x are zero and there is no bias, so the padded columns
    # of h stay exactly zero and do not pollute the BN sums below.
    h = jnp.dot(wc_ref[...], x_ref[...],
                preferred_element_type=jnp.float32)           # (C, N*HW_PAD)

    # ---- BatchNorm2d (training-mode batch stats) fused with ReLU ----
    # Single reduction pass (sum + sum-of-squares); divide by the TRUE element
    # count N*HW, not the padded width.
    inv_count = jnp.float32(1.0 / (N * HW))
    s1 = jnp.sum(h, axis=1, keepdims=True)                    # (C, 1)
    s2 = jnp.sum(h * h, axis=1, keepdims=True)                # (C, 1)
    mean = s1 * inv_count
    var = s2 * inv_count - mean * mean
    scale = gamma_ref[...] * lax.rsqrt(var + BN_EPS)          # (C, 1)
    shift = beta_ref[...] - mean * scale                      # (C, 1)
    h = jnp.maximum(h * scale + shift, 0.0)                   # one FMA + ReLU

    # ---- FC: out = sum_c H_c @ wfc[c] + bias,  H_c = (N, HW_PAD) ----
    # The torch channel-major flatten is never materialized: each per-channel
    # LHS is stacked from lane-aligned 384-wide sample slices (relayout-free
    # manual reshape), cast to bf16 once per channel, and fed to one
    # (N, HW_PAD) @ (HW_PAD, OUT_PAD) MXU matmul, accumulated in f32.  The zero
    # padded K rows of wfc guarantee the (ReLU'd) padding columns of h cannot
    # leak into the output.
    acc = None
    for c in range(C):                                        # C small & static
        lhs = jnp.concatenate(
            [h[c:c + 1, n * HW_PAD:(n + 1) * HW_PAD] for n in range(N)],
            axis=0).astype(jnp.bfloat16)                      # (N, HW_PAD)
        d = jnp.dot(lhs, wfc_ref[c], preferred_element_type=jnp.float32)
        acc = d if acc is None else acc + d                   # f32 accumulator
    out_ref[...] = acc + bfc_ref[...]                         # (N, OUT_PAD)


def prepare_policy_head_params(wc, bc, gamma, beta, wfc, bfc):
    """One-time weight layout prep (keep this out of the per-call path).

    `bc` (conv bias) is accepted for interface parity but intentionally
    dropped: under training-mode BatchNorm a per-channel pre-BN bias is
    cancelled exactly by the mean subtraction.
    """
    del bc
    C, C_in = wc.shape[0], wc.shape[1]
    wc2 = wc.reshape(C, C_in).astype(jnp.bfloat16)
    gamma2 = gamma.reshape(C, 1).astype(jnp.float32)
    beta2 = beta.reshape(C, 1).astype(jnp.float32)
    # torch Linear weight: (OUT_DIM, C*HW), flat input index = c*HW + hw.
    wfc3 = wfc.reshape(OUT_DIM, C, HW).transpose(1, 2, 0)      # (C, HW, OUT_DIM)
    wfc3 = jnp.pad(wfc3, ((0, 0), (0, HW_PAD - HW), (0, OUT_PAD - OUT_DIM)))
    wfc3 = wfc3.astype(jnp.bfloat16)                           # (C, HW_PAD, OUT_PAD)
    bfc2 = jnp.pad(bfc.astype(jnp.float32),
                   (0, OUT_PAD - OUT_DIM)).reshape(1, OUT_PAD)
    return dict(wc=wc2, gamma=gamma2, beta=beta2, wfc=wfc3, bfc=bfc2)


@jax.jit
def policy_head_forward(x_nchw, params):
    """x_nchw: (N, C_in, 19, 19). Returns (N, 362) float32."""
    N, C_in, H, W = x_nchw.shape
    assert (H, W) == (BOARD, BOARD)
    C = params["wc"].shape[0]

    # Layout plumbing stays in XLA (fused, outside the kernel): bf16 cast first
    # (halves the relayout bytes), channel-major transpose, per-sample lane pad
    # 361 -> 384.  In a full model the producing layer should emit this
    # (C_in, N*HW_PAD) bf16 layout directly so the transpose disappears.
    x_t = x_nchw.astype(jnp.bfloat16).reshape(N, C_in, HW).transpose(1, 0, 2)
    x_t = jnp.pad(x_t, ((0, 0), (0, 0), (0, HW_PAD - HW)))
    x_t = x_t.reshape(C_in, N * HW_PAD)

    args = (x_t, params["wc"], params["gamma"], params["beta"],
            params["wfc"], params["bfc"])

    flops = 2 * C * C_in * N * HW_PAD + 2 * N * C * HW_PAD * OUT_PAD
    bytes_accessed = (sum(int(a.size) * a.dtype.itemsize for a in args)
                      + N * OUT_PAD * 4)

    out_padded = pl.pallas_call(
        _policy_head_kernel,
        out_shape=jax.ShapeDtypeStruct((N, OUT_PAD), jnp.float32),
        in_specs=[pl.BlockSpec(memory_space=pltpu.MemorySpace.VMEM)] * len(args),
        out_specs=pl.BlockSpec(memory_space=pltpu.MemorySpace.VMEM),
        cost_estimate=pl.CostEstimate(flops=flops, transcendentals=C,
                                      bytes_accessed=bytes_accessed),
    )(*args)
    return out_padded[:, :OUT_DIM]


def _ref_forward(x, wc, bc, gamma, beta, wfc, bfc):
    """Pure-JAX f32 reference mirroring the PyTorch forward (training-mode BN)."""
    N = x.shape[0]
    w2 = wc.reshape(wc.shape[0], wc.shape[1])
    h = jnp.einsum('nihw,oi->nohw', x, w2,
                   precision=lax.Precision.HIGHEST) + bc[None, :, None, None]
    mean = h.mean(axis=(0, 2, 3), keepdims=True)
    var = ((h - mean) ** 2).mean(axis=(0, 2, 3), keepdims=True)
    h = (h - mean) * lax.rsqrt(var + BN_EPS)
    h = h * gamma[None, :, None, None] + beta[None, :, None, None]
    h = jnp.maximum(h, 0.0)
    flat = h.reshape(N, -1)
    return jnp.dot(flat, wfc.T, precision=lax.Precision.HIGHEST) + bfc


if __name__ == "__main__":
    filters, channels, batch = 64, 2, 2      # small but consistent with module

    key = jax.random.PRNGKey(0)
    kx, k1, k2, k3, k4, k5, k6 = jax.random.split(key, 7)

    x = jax.random.normal(kx, (batch, filters, BOARD, BOARD), jnp.float32)
    wc = 0.05 * jax.random.normal(k1, (channels, filters, 1, 1), jnp.float32)
    bc = 0.05 * jax.random.normal(k2, (channels,), jnp.float32)
    gamma = 1.0 + 0.1 * jax.random.normal(k3, (channels,), jnp.float32)
    beta = 0.05 * jax.random.normal(k4, (channels,), jnp.float32)
    wfc = 0.02 * jax.random.normal(k5, (OUT_DIM, channels * HW), jnp.float32)
    bfc = 0.02 * jax.random.normal(k6, (OUT_DIM,), jnp.float32)

    params = prepare_policy_head_params(wc, bc, gamma, beta, wfc, bfc)

    out = policy_head_forward(x, params)
    out = jax.block_until_ready(out)

    ref = _ref_forward(x, wc, bc, gamma, beta, wfc, bfc)
    assert out.shape == (batch, OUT_DIM)
    assert jnp.allclose(out, ref, atol=1e-2, rtol=1e-2), (
        "mismatch vs reference, max abs diff = %f"
        % float(jnp.max(jnp.abs(out - ref))))

    print("KERNEL_OK")
</pallas_src>

<mosaic_0001>
module attributes {stable_mosaic.version = 11 : i64} {
  func.func @_policy_head_kernel(%arg0: memref<64x768xbf16, #tpu.memory_space<vmem>>, %arg1: memref<2x64xbf16, #tpu.memory_space<vmem>>, %arg2: memref<2x1xf32, #tpu.memory_space<vmem>>, %arg3: memref<2x1xf32, #tpu.memory_space<vmem>>, %arg4: memref<2x384x384xbf16, #tpu.memory_space<vmem>>, %arg5: memref<1x384xf32, #tpu.memory_space<vmem>>, %arg6: memref<2x384xf32, #tpu.memory_space<vmem>>) attributes {dimension_semantics = [], scalar_prefetch = 0 : i64, scratch_operands = 0 : i64, tpu.core_type = #tpu.core_type<tc>} {
    %c0 = arith.constant 0 : index
    %c0_0 = arith.constant 0 : index
    %0 = vector.load %arg1[%c0, %c0_0] : memref<2x64xbf16, #tpu.memory_space<vmem>>, vector<2x64xbf16>
    %c0_1 = arith.constant 0 : index
    %c0_2 = arith.constant 0 : index
    %1 = vector.load %arg0[%c0_1, %c0_2] : memref<64x768xbf16, #tpu.memory_space<vmem>>, vector<64x768xbf16>
    %cst = arith.constant dense<0.000000e+00> : vector<2x768xf32>
    %2 = tpu.matmul %0, %1, %cst {dimension_numbers = #tpu.dot_dimension_numbers<[1], [0], [0], [1], [0, 0, 1, 1], [], []>} : vector<2x64xbf16>, vector<64x768xbf16>, vector<2x768xf32> -> vector<2x768xf32>
    %cst_3 = arith.constant dense<0.000000e+00> : vector<2xf32>
    %3 = vector.multi_reduction <add>, %2, %cst_3 [1] : vector<2x768xf32> to vector<2xf32>
    %4 = vector.shape_cast %3 : vector<2xf32> to vector<2x1xf32>
    %5 = arith.mulf %2, %2 : vector<2x768xf32>
    %cst_4 = arith.constant dense<0.000000e+00> : vector<2xf32>
    %6 = vector.multi_reduction <add>, %5, %cst_4 [1] : vector<2x768xf32> to vector<2xf32>
    %7 = vector.shape_cast %6 : vector<2xf32> to vector<2x1xf32>
    %cst_5 = arith.constant 0.00138504151 : f32
    %8 = vector.broadcast %cst_5 : f32 to vector<2x1xf32>
    %9 = arith.mulf %4, %8 : vector<2x1xf32>
    %cst_6 = arith.constant 0.00138504151 : f32
    %10 = vector.broadcast %cst_6 : f32 to vector<2x1xf32>
    %11 = arith.mulf %7, %10 : vector<2x1xf32>
    %12 = arith.mulf %9, %9 : vector<2x1xf32>
    %13 = arith.subf %11, %12 : vector<2x1xf32>
    %c0_7 = arith.constant 0 : index
    %c0_8 = arith.constant 0 : index
    %14 = vector.load %arg2[%c0_7, %c0_8] : memref<2x1xf32, #tpu.memory_space<vmem>>, vector<2x1xf32>
    %cst_9 = arith.constant 9.99999974E-6 : f32
    %15 = vector.broadcast %cst_9 : f32 to vector<2x1xf32>
    %16 = arith.addf %13, %15 : vector<2x1xf32>
    %17 = math.rsqrt %16 : vector<2x1xf32>
    %18 = arith.mulf %14, %17 : vector<2x1xf32>
    %c0_10 = arith.constant 0 : index
    %c0_11 = arith.constant 0 : index
    %19 = vector.load %arg3[%c0_10, %c0_11] : memref<2x1xf32, #tpu.memory_space<vmem>>, vector<2x1xf32>
    %20 = arith.mulf %9, %18 : vector<2x1xf32>
    %21 = arith.subf %19, %20 : vector<2x1xf32>
    %22 = vector.broadcast %18 : vector<2x1xf32> to vector<2x768xf32>
    %23 = arith.mulf %2, %22 : vector<2x768xf32>
    %24 = vector.broadcast %21 : vector<2x1xf32> to vector<2x768xf32>
    %25 = arith.addf %23, %24 : vector<2x768xf32>
    %cst_12 = arith.constant 0.000000e+00 : f32
    %26 = vector.broadcast %cst_12 : f32 to vector<2x768xf32>
    %27 = arith.maximumf %25, %26 : vector<2x768xf32>
    %28 = vector.extract_strided_slice %27 {offsets = [0, 0], sizes = [1, 384], strides = [1, 1]} : vector<2x768xf32> to vector<1x384xf32>
    %29 = vector.extract_strided_slice %27 {offsets = [0, 384], sizes = [1, 384], strides = [1, 1]} : vector<2x768xf32> to vector<1x384xf32>
    %30 = tpu.concatenate %28, %29 in 0 : vector<1x384xf32>, vector<1x384xf32> -> vector<2x384xf32>
    %31 = arith.truncf %30 : vector<2x384xf32> to vector<2x384xbf16>
    %c0_13 = arith.constant 0 : index
    %c0_14 = arith.constant 0 : index
    %c0_15 = arith.constant 0 : index
    %32 = vector.load %arg4[%c0_13, %c0_14, %c0_15] : memref<2x384x384xbf16, #tpu.memory_space<vmem>>, vector<1x384x384xbf16>
    %33 = vector.shape_cast %32 : vector<1x384x384xbf16> to vector<384x384xbf16>
    %cst_16 = arith.constant dense<0.000000e+00> : vector<2x384xf32>
    %34 = tpu.matmul %31, %33, %cst_16 {dimension_numbers = #tpu.dot_dimension_numbers<[1], [0], [0], [1], [0, 0, 1, 1], [], []>} : vector<2x384xbf16>, vector<384x384xbf16>, vector<2x384xf32> -> vector<2x384xf32>
    %35 = vector.extract_strided_slice %27 {offsets = [1, 0], sizes = [1, 384], strides = [1, 1]} : vector<2x768xf32> to vector<1x384xf32>
    %36 = vector.extract_strided_slice %27 {offsets = [1, 384], sizes = [1, 384], strides = [1, 1]} : vector<2x768xf32> to vector<1x384xf32>
    %37 = tpu.concatenate %35, %36 in 0 : vector<1x384xf32>, vector<1x384xf32> -> vector<2x384xf32>
    %38 = arith.truncf %37 : vector<2x384xf32> to vector<2x384xbf16>
    %c1 = arith.constant 1 : index
    %c0_17 = arith.constant 0 : index
    %c0_18 = arith.constant 0 : index
    %39 = vector.load %arg4[%c1, %c0_17, %c0_18] : memref<2x384x384xbf16, #tpu.memory_space<vmem>>, vector<1x384x384xbf16>
    %40 = vector.shape_cast %39 : vector<1x384x384xbf16> to vector<384x384xbf16>
    %cst_19 = arith.constant dense<0.000000e+00> : vector<2x384xf32>
    %41 = tpu.matmul %38, %40, %cst_19 {dimension_numbers = #tpu.dot_dimension_numbers<[1], [0], [0], [1], [0, 0, 1, 1], [], []>} : vector<2x384xbf16>, vector<384x384xbf16>, vector<2x384xf32> -> vector<2x384xf32>
    %42 = arith.addf %34, %41 : vector<2x384xf32>
    %c0_20 = arith.constant 0 : index
    %c0_21 = arith.constant 0 : index
    %43 = vector.load %arg5[%c0_20, %c0_21] : memref<1x384xf32, #tpu.memory_space<vmem>>, vector<1x384xf32>
    %44 = vector.broadcast %43 : vector<1x384xf32> to vector<2x384xf32>
    %45 = arith.addf %42, %44 : vector<2x384xf32>
    %c0_22 = arith.constant 0 : index
    %c0_23 = arith.constant 0 : index
    %46 = vector.load %arg6[%c0_22, %c0_23] : memref<2x384xf32, #tpu.memory_space<vmem>>, vector<2x384xf32>
    tpu.vector_store %arg6[%c0_22, %c0_23], %45 {strides = array<i32>} : memref<2x384xf32, #tpu.memory_space<vmem>>, vector<2x384xf32>,
    return
  }
}

</mosaic_0001>

<llo_original>
// kernel: policy_head_forward.1
$region0: #{policy_head_forward.1}
  #allocation0 [shape = 'u32[]', space=smem, size = 0x4, offset = 0x4, fixed_abs, tag = 'smem constant byte address 0x4 - core index']
  #allocation1 [shape = 'u32[144,128]{1,0:T(1,128)}', space=vmem, size = 0x12000, scoped, tag = 'internal scratch']
  %s0 = inlined_call_operand.vmem [shape: bf16[64,768], index: 0, kind: input, shape index: {}]
  %s1 = inlined_call_operand.vmem [shape: bf16[2,64], index: 1, kind: input, shape index: {}]
  %s2 = inlined_call_operand.vmem [shape: f32[2,1], index: 2, kind: input, shape index: {}]
  %s3 = inlined_call_operand.vmem [shape: f32[2,1], index: 3, kind: input, shape index: {}]
  %s4 = inlined_call_operand.vmem [shape: bf16[2,384,384], index: 4, kind: input, shape index: {}]
  %s5 = inlined_call_operand.vmem [shape: f32[1,384], index: 5, kind: input, shape index: {}]
  %s6 = inlined_call_operand.hbm [shape: f32[2,384], index: 6, kind: output, shape index: {}]
  %s7 = sld [smem:[#allocation0]]
  $region34: #{policy_head_forward.1} parent=0
    _
  %s9 = ssub.s32 1, %s7
  %s10 = scalar_select 0, %s9, %s7
  $region1: #{policy_head_forward.1} parent=0
    #allocation2 [shape = 'u8[3072]{0}', space=vmem, size = 0xc00, scoped, tag = 'output window, operand 0, single buffered']
    #allocation3 [shape = 's32[1]{0}', space=sflag, size = 0x4, scoped, tag = 'scoped memory for policy_head_forward.1']
    %11 = vsyncpa [#allocation3], 0
    // Predicated region
    $region2: #{policy_head_forward.1} parent=1 // pred_check
      _
    $region3: #{policy_head_forward.1} parent=1 // pred_check_branch
      %13 = sbr.rel (0) target = $region5
    $region4: #{policy_head_forward.1} parent=1 // pred_region
      _
    $region5: #{policy_head_forward.1} parent=1 // pred_fallthru
      _
    // Predicated region
    $region6: #{policy_head_forward.1} parent=1 // pred_check
      _
    $region7: #{policy_head_forward.1} parent=1 // pred_check_branch
      %15 = sbr.rel (0) target = $region9
    $region8: #{policy_head_forward.1} parent=1 // pred_region
      _
    $region9: #{policy_head_forward.1} parent=1 // pred_fallthru
      _
    // Predicated region
    $region10: #{policy_head_forward.1} parent=1 // pred_check
      _
    $region11: #{policy_head_forward.1} parent=1 // pred_check_branch
      %17 = sbr.rel (0) target = $region13
    $region12: #{policy_head_forward.1} parent=1 // pred_region
      _
    $region13: #{policy_head_forward.1} parent=1 // pred_fallthru
      _
    // Predicated region
    $region14: #{policy_head_forward.1} parent=1 // pred_check
      _
    $region15: #{policy_head_forward.1} parent=1 // pred_check_branch
      %19 = sbr.rel (0) target = $region17
    $region16: #{policy_head_forward.1} parent=1 // pred_region
      _
    $region17: #{policy_head_forward.1} parent=1 // pred_fallthru
      _
    // Predicated region
    $region18: #{policy_head_forward.1} parent=1 // pred_check
      _
    $region19: #{policy_head_forward.1} parent=1 // pred_check_branch
      %21 = sbr.rel (0) target = $region21
    $region20: #{policy_head_forward.1} parent=1 // pred_region
      _
    $region21: #{policy_head_forward.1} parent=1 // pred_fallthru
      _
    // Predicated region
    $region22: #{policy_head_forward.1} parent=1 // pred_check
      _
    $region23: #{policy_head_forward.1} parent=1 // pred_check_branch
      %23 = sbr.rel (0) target = $region25
    $region24: #{policy_head_forward.1} parent=1 // pred_region
      _
    $region25: #{policy_head_forward.1} parent=1 // pred_fallthru
      _
    %v25 = vld [vmem:[%s1] sm:$0x1]
    %v26 = vld [vmem:[%s0] sm:$0xff]
    %v27 = vld [vmem:[%s0 + $0x8] sm:$0xff]
    %v28 = vld [vmem:[%s0 + $0x10] sm:$0xff]
    %v29 = vld [vmem:[%s0 + $0x18] sm:$0xff]
    %v30 = vld [vmem:[%s0 + $0x20] sm:$0xff]
    %v31 = vld [vmem:[%s0 + $0x28] sm:$0xff]
    %v32 = vld [vmem:[%s0 + $0x30] sm:$0xff]
    %v33 = vld [vmem:[%s0 + $0x38] sm:$0xff]
    %v34 = vld [vmem:[%s0 + $0x40] sm:$0xff]
    %v35 = vld [vmem:[%s0 + $0x48] sm:$0xff]
    %v36 = vld [vmem:[%s0 + $0x50] sm:$0xff]
    %v37 = vld [vmem:[%s0 + $0x58] sm:$0xff]
    %v38 = vld [vmem:[%s0 + $0x60] sm:$0xff]
    %v39 = vld [vmem:[%s0 + $0x68] sm:$0xff]
    %v40 = vld [vmem:[%s0 + $0x70] sm:$0xff]
    %v41 = vld [vmem:[%s0 + $0x78] sm:$0xff]
    %v42 = vld [vmem:[%s0 + $0x80] sm:$0xff]
    %v43 = vld [vmem:[%s0 + $0x88] sm:$0xff]
    %v44 = vld [vmem:[%s0 + $0x90] sm:$0xff]
    %v45 = vld [vmem:[%s0 + $0x98] sm:$0xff]
    %v46 = vld [vmem:[%s0 + $0xa0] sm:$0xff]
    %v47 = vld [vmem:[%s0 + $0xa8] sm:$0xff]
    %v48 = vld [vmem:[%s0 + $0xb0] sm:$0xff]
    %v49 = vld [vmem:[%s0 + $0xb8] sm:$0xff]
    %v74 = vunpack.c.l.b16 %v26
    %v75 = vunpack.c.h.b16 %v26
    %v76 = vunpack.c.l.b16 %v27
    %v77 = vunpack.c.h.b16 %v27
    %v78 = vunpack.c.l.b16 %v28
    %v79 = vunpack.c.h.b16 %v28
    %v80 = vunpack.c.l.b16 %v29
    %v81 = vunpack.c.h.b16 %v29
    %v82 = vunpack.c.l.b16 %v30
    %v83 = vunpack.c.h.b16 %v30
    %v84 = vunpack.c.l.b16 %v31
    %v85 = vunpack.c.h.b16 %v31
    %v86 = vunpack.c.l.b16 %v32
    %v87 = vunpack.c.h.b16 %v32
    %v88 = vunpack.c.l.b16 %v33
    %v89 = vunpack.c.h.b16 %v33
    %v90 = vunpack.c.l.b16 %v34
    %v91 = vunpack.c.h.b16 %v34
    %v92 = vunpack.c.l.b16 %v35
    %v93 = vunpack.c.h.b16 %v35
    %v94 = vunpack.c.l.b16 %v36
    %v95 = vunpack.c.h.b16 %v36
    %v96 = vunpack.c.l.b16 %v37
    %v97 = vunpack.c.h.b16 %v37
    %v98 = vunpack.c.l.b16 %v38
    %v99 = vunpack.c.h.b16 %v38
    %v100 = vunpack.c.l.b16 %v39
    %v101 = vunpack.c.h.b16 %v39
    %v102 = vunpack.c.l.b16 %v40
    %v103 = vunpack.c.h.b16 %v40
    %v104 = vunpack.c.l.b16 %v41
    %v105 = vunpack.c.h.b16 %v41
    %v106 = vunpack.c.l.b16 %v42
    %v107 = vunpack.c.h.b16 %v42
    %v108 = vunpack.c.l.b16 %v43
    %v109 = vunpack.c.h.b16 %v43
    %v110 = vunpack.c.l.b16 %v44
    %v111 = vunpack.c.h.b16 %v44
    %v112 = vunpack.c.l.b16 %v45
    %v113 = vunpack.c.h.b16 %v45
    %v114 = vunpack.c.l.b16 %v46
    %v115 = vunpack.c.h.b16 %v46
    %v116 = vunpack.c.l.b16 %v47
    %v117 = vunpack.c.h.b16 %v47
    %v118 = vunpack.c.l.b16 %v48
    %v119 = vunpack.c.h.b16 %v48
    %v120 = vunpack.c.l.b16 %v49
    %v121 = vunpack.c.h.b16 %v49
    %v122 = vpack.c.b16 %v80, %v74
    %v123 = vpack.c.b16 %v81, %v75
    %v124 = vpack.c.b16 %v82, %v76
    %v125 = vpack.c.b16 %v83, %v77
    %v126 = vpack.c.b16 %v84, %v78
    %v127 = vpack.c.b16 %v85, %v79
    %v128 = vpack.c.b16 %v92, %v86
    %v129 = vpack.c.b16 %v93, %v87
    %v130 = vpack.c.b16 %v94, %v88
    %v131 = vpack.c.b16 %v95, %v89
    %v132 = vpack.c.b16 %v96, %v90
    %v133 = vpack.c.b16 %v97, %v91
    %v134 = vpack.c.b16 %v104, %v98
    %v135 = vpack.c.b16 %v105, %v99
    %v136 = vpack.c.b16 %v106, %v100
    %v137 = vpack.c.b16 %v107, %v101
    %v138 = vpack.c.b16 %v108, %v102
    %v139 = vpack.c.b16 %v109, %v103
    %v140 = vpack.c.b16 %v116, %v110
    %v141 = vpack.c.b16 %v117, %v111
    %v142 = vpack.c.b16 %v118, %v112
    %v143 = vpack.c.b16 %v119, %v113
    %v144 = vpack.c.b16 %v120, %v114
    %v145 = vpack.c.b16 %v121, %v115
    %vm170 = vcmask 523264
    %v172 = vsel %vm170, %v25, 0
    %174 = vmatprep.subr.bf16.mxu0 0
    %175 = vmatpush1.bf16.msra.mxu0 0
    %176 = vmatprep.subr.bf16.mxu0 0
    %177 = vmatpush1.bf16.msra.mxu0 0
    %178 = vmatprep.subr.bf16.mxu0 0
    %179 = vmatpush1.bf16.msra.mxu0 0
    %180 = vmatprep.subr.bf16.mxu0 0
    %181 = vmatpush1.bf16.msra.mxu0 0
    %182 = vmatprep.subr.bf16.mxu0 %v141
    %183 = vmatpush1.bf16.msra.mxu0 %v140
    %184 = vmatprep.subr.bf16.mxu0 %v135
    %185 = vmatpush1.bf16.msra.mxu0 %v134
    %186 = vmatprep.subr.bf16.mxu0 %v129
    %187 = vmatpush1.bf16.msra.mxu0 %v128
    %188 = vmatprep.subr.bf16.mxu0 %v123
    %189 = vmatpush1.bf16.msra.mxu0 %v122
    %190 = vmatprep.subr.bf16.mxu0 0
    %191 = vmatpush2.bf16.msra.mxu0 0
    %192 = vmatprep.subr.bf16.mxu0 0
    %193 = vmatpush2.bf16.msra.mxu0 0
    %194 = vmatprep.subr.bf16.mxu0 0
    %195 = vmatpush2.bf16.msra.mxu0 0
    %196 = vmatprep.subr.bf16.mxu0 0
    %197 = vmatpush2.bf16.msra.mxu0 0
    %198 = vmatprep.subr.bf16.mxu0 0
    %199 = vmatpush2.bf16.msra.mxu0 0
    %200 = vmatprep.subr.bf16.mxu0 0
    %201 = vmatpush2.bf16.msra.mxu0 0
    %202 = vmatprep.subr.bf16.mxu0 0
    %203 = vmatpush2.bf16.msra.mxu0 0
    %204 = vmatprep.subr.bf16.mxu0 0
    %205 = vmatpush2.bf16.msra.mxu0 0
    %206 = vmatprep.mubr.bf16.mxu0 0
    %207 = vmatmul.mubr.bf16.gmra.mxu0 %v172
    %v208 = vpop.f32.mrf.mxu0
    %v209 = vadd.f32 0.0, %v208
    %v210 = vpop.f32.mrf.mxu0
    %v211 = vadd.f32 0.0, %v210
    %v212 = vpop.f32.mrf.mxu0
    %v213 = vpop.f32.mrf.mxu0
    %214 = vdwg.mxu0
    %215 = vmatprep.subr.bf16.mxu0 0
    %216 = vmatpush1.bf16.msra.mxu0 0
    %217 = vmatprep.subr.bf16.mxu0 0
    %218 = vmatpush1.bf16.msra.mxu0 0
    %219 = vmatprep.subr.bf16.mxu0 0
    %220 = vmatpush1.bf16.msra.mxu0 0
    %221 = vmatprep.subr.bf16.mxu0 0
    %222 = vmatpush1.bf16.msra.mxu0 0
    %223 = vmatprep.subr.bf16.mxu0 %v143
    %224 = vmatpush1.bf16.msra.mxu0 %v142
    %225 = vmatprep.subr.bf16.mxu0 %v137
    %226 = vmatpush1.bf16.msra.mxu0 %v136
    %227 = vmatprep.subr.bf16.mxu0 %v131
    %228 = vmatpush1.bf16.msra.mxu0 %v130
    %229 = vmatprep.subr.bf16.mxu0 %v125
    %230 = vmatpush1.bf16.msra.mxu0 %v124
    %231 = vmatprep.subr.bf16.mxu0 0
    %232 = vmatpush2.bf16.msra.mxu0 0
    %233 = vmatprep.subr.bf16.mxu0 0
    %234 = vmatpush2.bf16.msra.mxu0 0
    %235 = vmatprep.subr.bf16.mxu0 0
    %236 = vmatpush2.bf16.msra.mxu0 0
    %237 = vmatprep.subr.bf16.mxu0 0
    %238 = vmatpush2.bf16.msra.mxu0 0
    %239 = vmatprep.subr.bf16.mxu0 0
    %240 = vmatpush2.bf16.msra.mxu0 0
    %241 = vmatprep.subr.bf16.mxu0 0
    %242 = vmatpush2.bf16.msra.mxu0 0
    %243 = vmatprep.subr.bf16.mxu0 0
    %244 = vmatpush2.bf16.msra.mxu0 0
    %245 = vmatprep.subr.bf16.mxu0 0
    %246 = vmatpush2.bf16.msra.mxu0 0
    %247 = vmatprep.mubr.bf16.mxu0 0
    %248 = vmatmul.mubr.bf16.gmra.mxu0 %v172
    %v249 = vpop.f32.mrf.mxu0
    %v250 = vadd.f32 0.0, %v249
    %v251 = vpop.f32.mrf.mxu0
    %v252 = vadd.f32 0.0, %v251
    %v253 = vpop.f32.mrf.mxu0
    %v254 = vpop.f32.mrf.mxu0
    %255 = vdwg.mxu0
    %256 = vmatprep.subr.bf16.mxu0 0
    %257 = vmatpush1.bf16.msra.mxu0 0
    %258 = vmatprep.subr.bf16.mxu0 0
    %259 = vmatpush1.bf16.msra.mxu0 0
    %260 = vmatprep.subr.bf16.mxu0 0
    %261 = vmatpush1.bf16.msra.mxu0 0
    %262 = vmatprep.subr.bf16.mxu0 0
    %263 = vmatpush1.bf16.msra.mxu0 0
    %264 = vmatprep.subr.bf16.mxu0 %v145
    %265 = vmatpush1.bf16.msra.mxu0 %v144
    %266 = vmatprep.subr.bf16.mxu0 %v139
    %267 = vmatpush1.bf16.msra.mxu0 %v138
    %268 = vmatprep.subr.bf16.mxu0 %v133
    %269 = vmatpush1.bf16.msra.mxu0 %v132
    %270 = vmatprep.subr.bf16.mxu0 %v127
    %271 = vmatpush1.bf16.msra.mxu0 %v126
    %272 = vmatprep.subr.bf16.mxu0 0
    %273 = vmatpush2.bf16.msra.mxu0 0
    %274 = vmatprep.subr.bf16.mxu0 0
    %275 = vmatpush2.bf16.msra.mxu0 0
    %276 = vmatprep.subr.bf16.mxu0 0
    %277 = vmatpush2.bf16.msra.mxu0 0
    %278 = vmatprep.subr.bf16.mxu0 0
    %279 = vmatpush2.bf16.msra.mxu0 0
    %280 = vmatprep.subr.bf16.mxu0 0
    %281 = vmatpush2.bf16.msra.mxu0 0
    %282 = vmatprep.subr.bf16.mxu0 0
    %283 = vmatpush2.bf16.msra.mxu0 0
    %284 = vmatprep.subr.bf16.mxu0 0
    %285 = vmatpush2.bf16.msra.mxu0 0
    %286 = vmatprep.subr.bf16.mxu0 0
    %287 = vmatpush2.bf16.msra.mxu0 0
    %288 = vmatprep.mubr.bf16.mxu0 0
    %289 = vmatmul.mubr.bf16.gmra.mxu0 %v172
    %v290 = vpop.f32.mrf.mxu0
    %v291 = vadd.f32 0.0, %v290
    %v292 = vpop.f32.mrf.mxu0
    %v293 = vadd.f32 0.0, %v292
    %v294 = vpop.f32.mrf.mxu0
    %v295 = vpop.f32.mrf.mxu0
    %296 = vdwg.mxu0
    %vm297 = vcmask 1041408
    %v298 = vsel %vm297, %v209, 0.0
    %v299 = vsel %vm297, %v211, 0.0
    %v300 = vadd.f32 %v298, %v299
    %v301 = vsel %vm297, %v250, 0.0
    %v302 = vadd.f32 %v300, %v301
    %v303 = vsel %vm297, %v252, 0.0
    %v304 = vadd.f32 %v302, %v303
    %v305 = vsel %vm297, %v291, 0.0
    %v306 = vadd.f32 %v304, %v305
    %v307 = vsel %vm297, %v293, 0.0
    %v308 = vadd.f32 %v306, %v307
    %309 = vadd.xlane.f32.xlu0 %v308
    %v310 = vpop.xlane.xlu0 %309
    %v311 = vmul.f32 %v209, %v209
    %v312 = vmul.f32 %v211, %v211
    %v313 = vmul.f32 %v250, %v250
    %v314 = vmul.f32 %v252, %v252
    %v315 = vmul.f32 %v291, %v291
    %v316 = vmul.f32 %v293, %v293
    %v317 = vsel %vm297, %v311, 0.0
    %v318 = vsel %vm297, %v312, 0.0
    %v319 = vadd.f32 %v317, %v318
    %v320 = vsel %vm297, %v313, 0.0
    %v321 = vadd.f32 %v319, %v320
    %v322 = vsel %vm297, %v314, 0.0
    %v323 = vadd.f32 %v321, %v322
    %v324 = vsel %vm297, %v315, 0.0
    %v325 = vadd.f32 %v323, %v324
    %v326 = vsel %vm297, %v316, 0.0
    %v327 = vadd.f32 %v325, %v326
    %328 = vadd.xlane.f32.xlu0 %v327
    %v329 = vpop.xlane.xlu0 %328
    %v330 = vmul.f32 %v310, 0.0013850415
    %v331 = vmul.f32 %v329, 0.0013850415
    %v332 = vmul.f32 %v330, %v330
    %v333 = vsub.f32 %v331, %v332
    %v334 = vld [vmem:[%s2] sm:$0x3]
    %v335 = vadd.f32 %v333, 1e-05
    %v336 = vrsqrt.pop %v335
    %v337 = vmul.f32 %v334, %v336
    %v338 = vld [vmem:[%s3] sm:$0x3]
    %v339 = vmul.f32 %v330, %v337
    %v340 = vsub.f32 %v338, %v339
    %342 = vset.pattern.permute.xlu0 0
    %343 = vperm.xlu0 %342, %v337
    %v344 = vpop.permute.xlu0 %343
    %v346 = vmul.f32 %v209, %v344
    %v347 = vmul.f32 %v211, %v344
    %v348 = vmul.f32 %v250, %v344
    %v349 = vmul.f32 %v252, %v344
    %v350 = vmul.f32 %v291, %v344
    %v351 = vmul.f32 %v293, %v344
    %353 = vset.pattern.permute.xlu0 0
    %354 = vperm.xlu0 %353, %v340
    %v355 = vpop.permute.xlu0 %354
    %v357 = vadd.f32 %v346, %v355
    %v358 = vadd.f32 %v347, %v355
    %v359 = vadd.f32 %v348, %v355
    %v360 = vadd.f32 %v349, %v355
    %v361 = vadd.f32 %v350, %v355
    %v362 = vadd.f32 %v351, %v355
    %v363 = vmax.f32 %v357, 0.0
    %v364 = vmax.f32 %v358, 0.0
    %v365 = vmax.f32 %v359, 0.0
    %v366 = vmax.f32 %v360, 0.0
    %v367 = vmax.f32 %v361, 0.0
    %v368 = vmax.f32 %v362, 0.0
    %v372 = vrot.slane %v366, 7
    %v373 = vrot.slane %v367, 7
    %v374 = vrot.slane %v368, 7
    %vm378 = vcmask 1040384
    %v379 = vsel %vm378, %v363, %v372
    %v380 = vsel %vm378, %v364, %v373
    %v381 = vsel %vm378, %v365, %v374
    %v382 = vpack.c.bf16 %v379, %v379
    %v383 = vpack.c.bf16 %v380, %v380
    %v384 = vpack.c.bf16 %v381, %v381
    %v385 = vld [vmem:[%s4] sm:$0xff]
    %v386 = vld [vmem:[%s4 + $0x8] sm:$0xf]
    %v387 = vld [vmem:[%s4 + $0xc] sm:$0xff]
    %v388 = vld [vmem:[%s4 + $0x14] sm:$0xf]
    %v389 = vld [vmem:[%s4 + $0x18] sm:$0xff]
    %v390 = vld [vmem:[%s4 + $0x20] sm:$0xf]
    %v391 = vld [vmem:[%s4 + $0x24] sm:$0xff]
    %v392 = vld [vmem:[%s4 + $0x2c] sm:$0xf]
    %v393 = vld [vmem:[%s4 + $0x30] sm:$0xff]
    %v394 = vld [vmem:[%s4 + $0x38] sm:$0xf]
    %v395 = vld [vmem:[%s4 + $0x3c] sm:$0xff]
    %v396 = vld [vmem:[%s4 + $0x44] sm:$0xf]
    %v397 = vld [vmem:[%s4 + $0x48] sm:$0xff]
    %v398 = vld [vmem:[%s4 + $0x50] sm:$0xf]
    %v399 = vld [vmem:[%s4 + $0x54] sm:$0xff]
    %v400 = vld [vmem:[%s4 + $0x5c] sm:$0xf]
    %v401 = vld [vmem:[%s4 + $0x60] sm:$0xff]
    %v402 = vld [vmem:[%s4 + $0x68] sm:$0xf]
    %v403 = vld [vmem:[%s4 + $0x6c] sm:$0xff]
    %v404 = vld [vmem:[%s4 + $0x74] sm:$0xf]
    %v405 = vld [vmem:[%s4 + $0x78] sm:$0xff]
    %v406 = vld [vmem:[%s4 + $0x80] sm:$0xf]
    %v407 = vld [vmem:[%s4 + $0x84] sm:$0xff]
    %v408 = vld [vmem:[%s4 + $0x8c] sm:$0xf]
    %v409 = vld [vmem:[%s4 + $0x90] sm:$0xff]
    %v410 = vld [vmem:[%s4 + $0x98] sm:$0xf]
    %v411 = vld [vmem:[%s4 + $0x9c] sm:$0xff]
    %v412 = vld [vmem:[%s4 + $0xa4] sm:$0xf]
    %v413 = vld [vmem:[%s4 + $0xa8] sm:$0xff]
    %v414 = vld [vmem:[%s4 + $0xb0] sm:$0xf]
    %v415 = vld [vmem:[%s4 + $0xb4] sm:$0xff]
    %v416 = vld [vmem:[%s4 + $0xbc] sm:$0xf]
    %v417 = vld [vmem:[%s4 + $0xc0] sm:$0xff]
    %v418 = vld [vmem:[%s4 + $0xc8] sm:$0xf]
    %v419 = vld [vmem:[%s4 + $0xcc] sm:$0xff]
    %v420 = vld [vmem:[%s4 + $0xd4] sm:$0xf]
    %v421 = vld [vmem:[%s4 + $0xd8] sm:$0xff]
    %v422 = vld [vmem:[%s4 + $0xe0] sm:$0xf]
    %v423 = vld [vmem:[%s4 + $0xe4] sm:$0xff]
    %v424 = vld [vmem:[%s4 + $0xec] sm:$0xf]
    %v425 = vld [vmem:[%s4 + $0xf0] sm:$0xff]
    %v426 = vld [vmem:[%s4 + $0xf8] sm:$0xf]
    %v427 = vld [vmem:[%s4 + $0xfc] sm:$0xff]
    %v428 = vld [vmem:[%s4 + $0x104] sm:$0xf]
    %v429 = vld [vmem:[%s4 + $0x108] sm:$0xff]
    %v430 = vld [vmem:[%s4 + $0x110] sm:$0xf]
    %v431 = vld [vmem:[%s4 + $0x114] sm:$0xff]
    %v432 = vld [vmem:[%s4 + $0x11c] sm:$0xf]
    %v433 = vld [vmem:[%s4 + $0x120] sm:$0xff]
    %v434 = vld [vmem:[%s4 + $0x128] sm:$0xf]
    %v435 = vld [vmem:[%s4 + $0x12c] sm:$0xff]
    %v436 = vld [vmem:[%s4 + $0x134] sm:$0xf]
    %v437 = vld [vmem:[%s4 + $0x138] sm:$0xff]
    %v438 = vld [vmem:[%s4 + $0x140] sm:$0xf]
    %v439 = vld [vmem:[%s4 + $0x144] sm:$0xff]
    %v440 = vld [vmem:[%s4 + $0x14c] sm:$0xf]
    %v441 = vld [vmem:[%s4 + $0x150] sm:$0xff]
    %v442 = vld [vmem:[%s4 + $0x158] sm:$0xf]
    %v443 = vld [vmem:[%s4 + $0x15c] sm:$0xff]
    %v444 = vld [vmem:[%s4 + $0x164] sm:$0xf]
    %v445 = vld [vmem:[%s4 + $0x168] sm:$0xff]
    %v446 = vld [vmem:[%s4 + $0x170] sm:$0xf]
    %v447 = vld [vmem:[%s4 + $0x174] sm:$0xff]
    %v448 = vld [vmem:[%s4 + $0x17c] sm:$0xf]
    %v449 = vld [vmem:[%s4 + $0x180] sm:$0xff]
    %v450 = vld [vmem:[%s4 + $0x188] sm:$0xf]
    %v451 = vld [vmem:[%s4 + $0x18c] sm:$0xff]
    %v452 = vld [vmem:[%s4 + $0x194] sm:$0xf]
    %v453 = vld [vmem:[%s4 + $0x198] sm:$0xff]
    %v454 = vld [vmem:[%s4 + $0x1a0] sm:$0xf]
    %v455 = vld [vmem:[%s4 + $0x1a4] sm:$0xff]
    %v456 = vld [vmem:[%s4 + $0x1ac] sm:$0xf]
    %v457 = vld [vmem:[%s4 + $0x1b0] sm:$0xff]
    %v458 = vld [vmem:[%s4 + $0x1b8] sm:$0xf]
    %v459 = vld [vmem:[%s4 + $0x1bc] sm:$0xff]
    %v460 = vld [vmem:[%s4 + $0x1c4] sm:$0xf]
    %v461 = vld [vmem:[%s4 + $0x1c8] sm:$0xff]
    %v462 = vld [vmem:[%s4 + $0x1d0] sm:$0xf]
    %v463 = vld [vmem:[%s4 + $0x1d4] sm:$0xff]
    %v464 = vld [vmem:[%s4 + $0x1dc] sm:$0xf]
    %v465 = vld [vmem:[%s4 + $0x1e0] sm:$0xff]
    %v466 = vld [vmem:[%s4 + $0x1e8] sm:$0xf]
    %v467 = vld [vmem:[%s4 + $0x1ec] sm:$0xff]
    %v468 = vld [vmem:[%s4 + $0x1f4] sm:$0xf]
    %v469 = vld [vmem:[%s4 + $0x1f8] sm:$0xff]
    %v470 = vld [vmem:[%s4 + $0x200] sm:$0xf]
    %v471 = vld [vmem:[%s4 + $0x204] sm:$0xff]
    %v472 = vld [vmem:[%s4 + $0x20c] sm:$0xf]
    %v473 = vld [vmem:[%s4 + $0x210] sm:$0xff]
    %v474 = vld [vmem:[%s4 + $0x218] sm:$0xf]
    %v475 = vld [vmem:[%s4 + $0x21c] sm:$0xff]
    %v476 = vld [vmem:[%s4 + $0x224] sm:$0xf]
    %v477 = vld [vmem:[%s4 + $0x228] sm:$0xff]
    %v478 = vld [vmem:[%s4 + $0x230] sm:$0xf]
    %v479 = vld [vmem:[%s4 + $0x234] sm:$0xff]
    %v480 = vld [vmem:[%s4 + $0x23c] sm:$0xf]
    %v484 = vrot.slane %v363, 1
    %v485 = vrot.slane %v364, 1
    %v486 = vrot.slane %v365, 1
    %v490 = vsel %vm378, %v484, %v366
    %v491 = vsel %vm378, %v485, %v367
    %v492 = vsel %vm378, %v486, %v368
    %v493 = vpack.c.bf16 %v490, %v490
    %v494 = vpack.c.bf16 %v491, %v491
    %v495 = vpack.c.bf16 %v492, %v492
    %s496 = scalar_lea.vmem %s4, 576
    %v497 = vld [vmem:[%s496] sm:$0xff]
    %v498 = vld [vmem:[%s496 + $0x8] sm:$0xf]
    %v499 = vld [vmem:[%s496 + $0xc] sm:$0xff]
    %v500 = vld [vmem:[%s496 + $0x14] sm:$0xf]
    %v501 = vld [vmem:[%s496 + $0x18] sm:$0xff]
    %v502 = vld [vmem:[%s496 + $0x20] sm:$0xf]
    %v503 = vld [vmem:[%s496 + $0x24] sm:$0xff]
    %v504 = vld [vmem:[%s496 + $0x2c] sm:$0xf]
    %v505 = vld [vmem:[%s496 + $0x30] sm:$0xff]
    %v506 = vld [vmem:[%s496 + $0x38] sm:$0xf]
    %v507 = vld [vmem:[%s496 + $0x3c] sm:$0xff]
    %v508 = vld [vmem:[%s496 + $0x44] sm:$0xf]
    %v509 = vld [vmem:[%s496 + $0x48] sm:$0xff]
    %v510 = vld [vmem:[%s496 + $0x50] sm:$0xf]
    %v511 = vld [vmem:[%s496 + $0x54] sm:$0xff]
    %v512 = vld [vmem:[%s496 + $0x5c] sm:$0xf]
    %v513 = vld [vmem:[%s496 + $0x60] sm:$0xff]
    %v514 = vld [vmem:[%s496 + $0x68] sm:$0xf]
    %v515 = vld [vmem:[%s496 + $0x6c] sm:$0xff]
    %v516 = vld [vmem:[%s496 + $0x74] sm:$0xf]
    %v517 = vld [vmem:[%s496 + $0x78] sm:$0xff]
    %v518 = vld [vmem:[%s496 + $0x80] sm:$0xf]
    %v519 = vld [vmem:[%s496 + $0x84] sm:$0xff]
    %v520 = vld [vmem:[%s496 + $0x8c] sm:$0xf]
    %v521 = vld [vmem:[%s496 + $0x90] sm:$0xff]
    %v522 = vld [vmem:[%s496 + $0x98] sm:$0xf]
    %v523 = vld [vmem:[%s496 + $0x9c] sm:$0xff]
    %v524 = vld [vmem:[%s496 + $0xa4] sm:$0xf]
    %v525 = vld [vmem:[%s496 + $0xa8] sm:$0xff]
    %v526 = vld [vmem:[%s496 + $0xb0] sm:$0xf]
    %v527 = vld [vmem:[%s496 + $0xb4] sm:$0xff]
    %v528 = vld [vmem:[%s496 + $0xbc] sm:$0xf]
    %v529 = vld [vmem:[%s496 + $0xc0] sm:$0xff]
    %v530 = vld [vmem:[%s496 + $0xc8] sm:$0xf]
    %v531 = vld [vmem:[%s496 + $0xcc] sm:$0xff]
    %v532 = vld [vmem:[%s496 + $0xd4] sm:$0xf]
    %v533 = vld [vmem:[%s496 + $0xd8] sm:$0xff]
    %v534 = vld [vmem:[%s496 + $0xe0] sm:$0xf]
    %v535 = vld [vmem:[%s496 + $0xe4] sm:$0xff]
    %v536 = vld [vmem:[%s496 + $0xec] sm:$0xf]
    %v537 = vld [vmem:[%s496 + $0xf0] sm:$0xff]
    %v538 = vld [vmem:[%s496 + $0xf8] sm:$0xf]
    %v539 = vld [vmem:[%s496 + $0xfc] sm:$0xff]
    %v540 = vld [vmem:[%s496 + $0x104] sm:$0xf]
    %v541 = vld [vmem:[%s496 + $0x108] sm:$0xff]
    %v542 = vld [vmem:[%s496 + $0x110] sm:$0xf]
    %v543 = vld [vmem:[%s496 + $0x114] sm:$0xff]
    %v544 = vld [vmem:[%s496 + $0x11c] sm:$0xf]
    %v545 = vld [vmem:[%s496 + $0x120] sm:$0xff]
    %v546 = vld [vmem:[%s496 + $0x128] sm:$0xf]
    %v547 = vld [vmem:[%s496 + $0x12c] sm:$0xff]
    %v548 = vld [vmem:[%s496 + $0x134] sm:$0xf]
    %v549 = vld [vmem:[%s496 + $0x138] sm:$0xff]
    %v550 = vld [vmem:[%s496 + $0x140] sm:$0xf]
    %v551 = vld [vmem:[%s496 + $0x144] sm:$0xff]
    %v552 = vld [vmem:[%s496 + $0x14c] sm:$0xf]
    %v553 = vld [vmem:[%s496 + $0x150] sm:$0xff]
    %v554 = vld [vmem:[%s496 + $0x158] sm:$0xf]
    %v555 = vld [vmem:[%s496 + $0x15c] sm:$0xff]
    %v556 = vld [vmem:[%s496 + $0x164] sm:$0xf]
    %v557 = vld [vmem:[%s496 + $0x168] sm:$0xff]
    %v558 = vld [vmem:[%s496 + $0x170] sm:$0xf]
    %v559 = vld [vmem:[%s496 + $0x174] sm:$0xff]
    %v560 = vld [vmem:[%s496 + $0x17c] sm:$0xf]
    %v561 = vld [vmem:[%s496 + $0x180] sm:$0xff]
    %v562 = vld [vmem:[%s496 + $0x188] sm:$0xf]
    %v563 = vld [vmem:[%s496 + $0x18c] sm:$0xff]
    %v564 = vld [vmem:[%s496 + $0x194] sm:$0xf]
    %v565 = vld [vmem:[%s496 + $0x198] sm:$0xff]
    %v566 = vld [vmem:[%s496 + $0x1a0] sm:$0xf]
    %v567 = vld [vmem:[%s496 + $0x1a4] sm:$0xff]
    %v568 = vld [vmem:[%s496 + $0x1ac] sm:$0xf]
    %v569 = vld [vmem:[%s496 + $0x1b0] sm:$0xff]
    %v570 = vld [vmem:[%s496 + $0x1b8] sm:$0xf]
    %v571 = vld [vmem:[%s496 + $0x1bc] sm:$0xff]
    %v572 = vld [vmem:[%s496 + $0x1c4] sm:$0xf]
    %v573 = vld [vmem:[%s496 + $0x1c8] sm:$0xff]
    %v574 = vld [vmem:[%s496 + $0x1d0] sm:$0xf]
    %v575 = vld [vmem:[%s496 + $0x1d4] sm:$0xff]
    %v576 = vld [vmem:[%s496 + $0x1dc] sm:$0xf]
    %v577 = vld [vmem:[%s496 + $0x1e0] sm:$0xff]
    %v578 = vld [vmem:[%s496 + $0x1e8] sm:$0xf]
    %v579 = vld [vmem:[%s496 + $0x1ec] sm:$0xff]
    %v580 = vld [vmem:[%s496 + $0x1f4] sm:$0xf]
    %v581 = vld [vmem:[%s496 + $0x1f8] sm:$0xff]
    %v582 = vld [vmem:[%s496 + $0x200] sm:$0xf]
    %v583 = vld [vmem:[%s496 + $0x204] sm:$0xff]
    %v584 = vld [vmem:[%s496 + $0x20c] sm:$0xf]
    %v585 = vld [vmem:[%s496 + $0x210] sm:$0xff]
    %v586 = vld [vmem:[%s496 + $0x218] sm:$0xf]
    %v587 = vld [vmem:[%s496 + $0x21c] sm:$0xff]
    %v588 = vld [vmem:[%s496 + $0x224] sm:$0xf]
    %v589 = vld [vmem:[%s496 + $0x228] sm:$0xff]
    %v590 = vld [vmem:[%s496 + $0x230] sm:$0xf]
    %v591 = vld [vmem:[%s496 + $0x234] sm:$0xff]
    %v592 = vld [vmem:[%s496 + $0x23c] sm:$0xf]
    %v689 = vunpack.c.l.b16 %v497
    %v690 = vunpack.c.h.b16 %v497
    %v691 = vunpack.c.l.b16 %v498
    %v692 = vunpack.c.l.b16 %v499
    %v693 = vunpack.c.h.b16 %v499
    %v694 = vunpack.c.l.b16 %v500
    %v695 = vunpack.c.l.b16 %v501
    %v696 = vunpack.c.h.b16 %v501
    %v697 = vunpack.c.l.b16 %v502
    %v698 = vunpack.c.l.b16 %v503
    %v699 = vunpack.c.h.b16 %v503
    %v700 = vunpack.c.l.b16 %v504
    %v701 = vunpack.c.l.b16 %v505
    %v702 = vunpack.c.h.b16 %v505
    %v703 = vunpack.c.l.b16 %v506
    %v704 = vunpack.c.l.b16 %v507
    %v705 = vunpack.c.h.b16 %v507
    %v706 = vunpack.c.l.b16 %v508
    %v707 = vunpack.c.l.b16 %v509
    %v708 = vunpack.c.h.b16 %v509
    %v709 = vunpack.c.l.b16 %v510
    %v710 = vunpack.c.l.b16 %v511
    %v711 = vunpack.c.h.b16 %v511
    %v712 = vunpack.c.l.b16 %v512
    %v713 = vunpack.c.l.b16 %v513
    %v714 = vunpack.c.h.b16 %v513
    %v715 = vunpack.c.l.b16 %v514
    %v716 = vunpack.c.l.b16 %v515
    %v717 = vunpack.c.h.b16 %v515
    %v718 = vunpack.c.l.b16 %v516
    %v719 = vunpack.c.l.b16 %v517
    %v720 = vunpack.c.h.b16 %v517
    %v721 = vunpack.c.l.b16 %v518
    %v722 = vunpack.c.l.b16 %v519
    %v723 = vunpack.c.h.b16 %v519
    %v724 = vunpack.c.l.b16 %v520
    %v725 = vunpack.c.l.b16 %v521
    %v726 = vunpack.c.h.b16 %v521
    %v727 = vunpack.c.l.b16 %v522
    %v728 = vunpack.c.l.b16 %v523
    %v729 = vunpack.c.h.b16 %v523
    %v730 = vunpack.c.l.b16 %v524
    %v731 = vunpack.c.l.b16 %v525
    %v732 = vunpack.c.h.b16 %v525
    %v733 = vunpack.c.l.b16 %v526
    %v734 = vunpack.c.l.b16 %v527
    %v735 = vunpack.c.h.b16 %v527
    %v736 = vunpack.c.l.b16 %v528
    %v737 = vunpack.c.l.b16 %v529
    %v738 = vunpack.c.h.b16 %v529
    %v739 = vunpack.c.l.b16 %v530
    %v740 = vunpack.c.l.b16 %v531
    %v741 = vunpack.c.h.b16 %v531
    %v742 = vunpack.c.l.b16 %v532
    %v743 = vunpack.c.l.b16 %v533
    %v744 = vunpack.c.h.b16 %v533
    %v745 = vunpack.c.l.b16 %v534
    %v746 = vunpack.c.l.b16 %v535
    %v747 = vunpack.c.h.b16 %v535
    %v748 = vunpack.c.l.b16 %v536
    %v749 = vunpack.c.l.b16 %v537
    %v750 = vunpack.c.h.b16 %v537
    %v751 = vunpack.c.l.b16 %v538
    %v752 = vunpack.c.l.b16 %v539
    %v753 = vunpack.c.h.b16 %v539
    %v754 = vunpack.c.l.b16 %v540
    %v755 = vunpack.c.l.b16 %v541
    %v756 = vunpack.c.h.b16 %v541
    %v757 = vunpack.c.l.b16 %v542
    %v758 = vunpack.c.l.b16 %v543
    %v759 = vunpack.c.h.b16 %v543
    %v760 = vunpack.c.l.b16 %v544
    %v761 = vunpack.c.l.b16 %v545
    %v762 = vunpack.c.h.b16 %v545
    %v763 = vunpack.c.l.b16 %v546
    %v764 = vunpack.c.l.b16 %v547
    %v765 = vunpack.c.h.b16 %v547
    %v766 = vunpack.c.l.b16 %v548
    %v767 = vunpack.c.l.b16 %v549
    %v768 = vunpack.c.h.b16 %v549
    %v769 = vunpack.c.l.b16 %v550
    %v770 = vunpack.c.l.b16 %v551
    %v771 = vunpack.c.h.b16 %v551
    %v772 = vunpack.c.l.b16 %v552
    %v773 = vunpack.c.l.b16 %v553
    %v774 = vunpack.c.h.b16 %v553
    %v775 = vunpack.c.l.b16 %v554
    %v776 = vunpack.c.l.b16 %v555
    %v777 = vunpack.c.h.b16 %v555
    %v778 = vunpack.c.l.b16 %v556
    %v779 = vunpack.c.l.b16 %v557
    %v780 = vunpack.c.h.b16 %v557
    %v781 = vunpack.c.l.b16 %v558
    %v782 = vunpack.c.l.b16 %v559
    %v783 = vunpack.c.h.b16 %v559
    %v784 = vunpack.c.l.b16 %v560
    %v785 = vunpack.c.l.b16 %v561
    %v786 = vunpack.c.h.b16 %v561
    %v787 = vunpack.c.l.b16 %v562
    %v788 = vunpack.c.l.b16 %v563
    %v789 = vunpack.c.h.b16 %v563
    %v790 = vunpack.c.l.b16 %v564
    %v791 = vunpack.c.l.b16 %v565
    %v792 = vunpack.c.h.b16 %v565
    %v793 = vunpack.c.l.b16 %v566
    %v794 = vunpack.c.l.b16 %v567
    %v795 = vunpack.c.h.b16 %v567
    %v796 = vunpack.c.l.b16 %v568
    %v797 = vunpack.c.l.b16 %v569
    %v798 = vunpack.c.h.b16 %v569
    %v799 = vunpack.c.l.b16 %v570
    %v800 = vunpack.c.l.b16 %v571
    %v801 = vunpack.c.h.b16 %v571
    %v802 = vunpack.c.l.b16 %v572
    %v803 = vunpack.c.l.b16 %v573
    %v804 = vunpack.c.h.b16 %v573
    %v805 = vunpack.c.l.b16 %v574
    %v806 = vunpack.c.l.b16 %v575
    %v807 = vunpack.c.h.b16 %v575
    %v808 = vunpack.c.l.b16 %v576
    %v809 = vunpack.c.l.b16 %v577
    %v810 = vunpack.c.h.b16 %v577
    %v811 = vunpack.c.l.b16 %v578
    %v812 = vunpack.c.l.b16 %v579
    %v813 = vunpack.c.h.b16 %v579
    %v814 = vunpack.c.l.b16 %v580
    %v815 = vunpack.c.l.b16 %v581
    %v816 = vunpack.c.h.b16 %v581
    %v817 = vunpack.c.l.b16 %v582
    %v818 = vunpack.c.l.b16 %v583
    %v819 = vunpack.c.h.b16 %v583
    %v820 = vunpack.c.l.b16 %v584
    %v821 = vunpack.c.l.b16 %v585
    %v822 = vunpack.c.h.b16 %v585
    %v823 = vunpack.c.l.b16 %v586
    %v824 = vunpack.c.l.b16 %v587
    %v825 = vunpack.c.h.b16 %v587
    %v826 = vunpack.c.l.b16 %v588
    %v827 = vunpack.c.l.b16 %v589
    %v828 = vunpack.c.h.b16 %v589
    %v829 = vunpack.c.l.b16 %v590
    %v830 = vunpack.c.l.b16 %v591
    %v831 = vunpack.c.h.b16 %v591
    %v832 = vunpack.c.l.b16 %v592
    %v833 = vpack.c.b16 %v692, %v689
    %v834 = vpack.c.b16 %v693, %v690
    %v835 = vpack.c.b16 %v694, %v691
    %v836 = vpack.c.b16 %v698, %v695
    %v837 = vpack.c.b16 %v699, %v696
    %v838 = vpack.c.b16 %v700, %v697
    %v839 = vpack.c.b16 %v704, %v701
    %v840 = vpack.c.b16 %v705, %v702
    %v841 = vpack.c.b16 %v706, %v703
    %v842 = vpack.c.b16 %v710, %v707
    %v843 = vpack.c.b16 %v711, %v708
    %v844 = vpack.c.b16 %v712, %v709
    %v845 = vpack.c.b16 %v716, %v713
    %v846 = vpack.c.b16 %v717, %v714
    %v847 = vpack.c.b16 %v718, %v715
    %v848 = vpack.c.b16 %v722, %v719
    %v849 = vpack.c.b16 %v723, %v720
    %v850 = vpack.c.b16 %v724, %v721
    %v851 = vpack.c.b16 %v728, %v725
    %v852 = vpack.c.b16 %v729, %v726
    %v853 = vpack.c.b16 %v730, %v727
    %v854 = vpack.c.b16 %v734, %v731
    %v855 = vpack.c.b16 %v735, %v732
    %v856 = vpack.c.b16 %v736, %v733
    %v857 = vpack.c.b16 %v740, %v737
    %v858 = vpack.c.b16 %v741, %v738
    %v859 = vpack.c.b16 %v742, %v739
    %v860 = vpack.c.b16 %v746, %v743
    %v861 = vpack.c.b16 %v747, %v744
    %v862 = vpack.c.b16 %v748, %v745
    %v863 = vpack.c.b16 %v752, %v749
    %v864 = vpack.c.b16 %v753, %v750
    %v865 = vpack.c.b16 %v754, %v751
    %v866 = vpack.c.b16 %v758, %v755
    %v867 = vpack.c.b16 %v759, %v756
    %v868 = vpack.c.b16 %v760, %v757
    %v869 = vpack.c.b16 %v764, %v761
    %v870 = vpack.c.b16 %v765, %v762
    %v871 = vpack.c.b16 %v766, %v763
    %v872 = vpack.c.b16 %v770, %v767
    %v873 = vpack.c.b16 %v771, %v768
    %v874 = vpack.c.b16 %v772, %v769
    %v875 = vpack.c.b16 %v776, %v773
    %v876 = vpack.c.b16 %v777, %v774
    %v877 = vpack.c.b16 %v778, %v775
    %v878 = vpack.c.b16 %v782, %v779
    %v879 = vpack.c.b16 %v783, %v780
    %v880 = vpack.c.b16 %v784, %v781
    %v881 = vpack.c.b16 %v788, %v785
    %v882 = vpack.c.b16 %v789, %v786
    %v883 = vpack.c.b16 %v790, %v787
    %v884 = vpack.c.b16 %v794, %v791
    %v885 = vpack.c.b16 %v795, %v792
    %v886 = vpack.c.b16 %v796, %v793
    %v887 = vpack.c.b16 %v800, %v797
    %v888 = vpack.c.b16 %v801, %v798
    %v889 = vpack.c.b16 %v802, %v799
    %v890 = vpack.c.b16 %v806, %v803
    %v891 = vpack.c.b16 %v807, %v804
    %v892 = vpack.c.b16 %v808, %v805
    %v893 = vpack.c.b16 %v812, %v809
    %v894 = vpack.c.b16 %v813, %v810
    %v895 = vpack.c.b16 %v814, %v811
    %v896 = vpack.c.b16 %v818, %v815
    %v897 = vpack.c.b16 %v819, %v816
    %v898 = vpack.c.b16 %v820, %v817
    %v899 = vpack.c.b16 %v824, %v821
    %v900 = vpack.c.b16 %v825, %v822
    %v901 = vpack.c.b16 %v826, %v823
    %v902 = vpack.c.b16 %v830, %v827
    %v903 = vpack.c.b16 %v831, %v828
    %v904 = vpack.c.b16 %v832, %v829
    %977 = vmatprep.subr.bf16.mxu0 %v855
    %978 = vmatpush1.bf16.msra.mxu0 %v854
    %979 = vmatprep.subr.bf16.mxu0 %v852
    %980 = vmatpush1.bf16.msra.mxu0 %v851
    %981 = vmatprep.subr.bf16.mxu0 %v849
    %982 = vmatpush1.bf16.msra.mxu0 %v848
    %983 = vmatprep.subr.bf16.mxu0 %v846
    %984 = vmatpush1.bf16.msra.mxu0 %v845
    %985 = vmatprep.subr.bf16.mxu0 %v843
    %986 = vmatpush1.bf16.msra.mxu0 %v842
    %987 = vmatprep.subr.bf16.mxu0 %v840
    %988 = vmatpush1.bf16.msra.mxu0 %v839
    %989 = vmatprep.subr.bf16.mxu0 %v837
    %990 = vmatpush1.bf16.msra.mxu0 %v836
    %991 = vmatprep.subr.bf16.mxu0 %v834
    %992 = vmatpush1.bf16.msra.mxu0 %v833
    %993 = vmatprep.subr.bf16.mxu0 %v879
    %994 = vmatpush2.bf16.msra.mxu0 %v878
    %995 = vmatprep.subr.bf16.mxu0 %v876
    %996 = vmatpush2.bf16.msra.mxu0 %v875
    %997 = vmatprep.subr.bf16.mxu0 %v873
    %998 = vmatpush2.bf16.msra.mxu0 %v872
    %999 = vmatprep.subr.bf16.mxu0 %v870
    %1000 = vmatpush2.bf16.msra.mxu0 %v869
    %1001 = vmatprep.subr.bf16.mxu0 %v867
    %1002 = vmatpush2.bf16.msra.mxu0 %v866
    %1003 = vmatprep.subr.bf16.mxu0 %v864
    %1004 = vmatpush2.bf16.msra.mxu0 %v863
    %1005 = vmatprep.subr.bf16.mxu0 %v861
    %1006 = vmatpush2.bf16.msra.mxu0 %v860
    %1007 = vmatprep.subr.bf16.mxu0 %v858
    %1008 = vmatpush2.bf16.msra.mxu0 %v857
    %1009 = vmatprep.mubr.bf16.mxu0 %v494
    %1010 = vmatmul.mubr.bf16.gmra.mxu0 %v493
    %v1011 = vpop.f32.mrf.mxu0
    %v1012 = vadd.f32 0.0, %v1011
    %v1013 = vpop.f32.mrf.mxu0
    %v1014 = vadd.f32 0.0, %v1013
    %v1015 = vpop.f32.mrf.mxu0
    %v1016 = vpop.f32.mrf.mxu0
    %1017 = vdwg.mxu0
    %1018 = vmatprep.subr.bf16.mxu0 %v903
    %1019 = vmatpush1.bf16.msra.mxu0 %v902
    %1020 = vmatprep.subr.bf16.mxu0 %v900
    %1021 = vmatpush1.bf16.msra.mxu0 %v899
    %1022 = vmatprep.subr.bf16.mxu0 %v897
    %1023 = vmatpush1.bf16.msra.mxu0 %v896
    %1024 = vmatprep.subr.bf16.mxu0 %v894
    %1025 = vmatpush1.bf16.msra.mxu0 %v893
    %1026 = vmatprep.subr.bf16.mxu0 %v891
    %1027 = vmatpush1.bf16.msra.mxu0 %v890
    %1028 = vmatprep.subr.bf16.mxu0 %v888
    %1029 = vmatpush1.bf16.msra.mxu0 %v887
    %1030 = vmatprep.subr.bf16.mxu0 %v885
    %1031 = vmatpush1.bf16.msra.mxu0 %v884
    %1032 = vmatprep.subr.bf16.mxu0 %v882
    %1033 = vmatpush1.bf16.msra.mxu0 %v881
    %1034 = vmatprep.subr.bf16.mxu0 0
    %1035 = vmatpush2.bf16.msra.mxu0 0
    %1036 = vmatprep.subr.bf16.mxu0 0
    %1037 = vmatpush2.bf16.msra.mxu0 0
    %1038 = vmatprep.subr.bf16.mxu0 0
    %1039 = vmatpush2.bf16.msra.mxu0 0
    %1040 = vmatprep.subr.bf16.mxu0 0
    %1041 = vmatpush2.bf16.msra.mxu0 0
    %1042 = vmatprep.subr.bf16.mxu0 0
    %1043 = vmatpush2.bf16.msra.mxu0 0
    %1044 = vmatprep.subr.bf16.mxu0 0
    %1045 = vmatpush2.bf16.msra.mxu0 0
    %1046 = vmatprep.subr.bf16.mxu0 0
    %1047 = vmatpush2.bf16.msra.mxu0 0
    %1048 = vmatprep.subr.bf16.mxu0 0
    %1049 = vmatpush2.bf16.msra.mxu0 0
    %1050 = vmatprep.mubr.bf16.mxu0 0
    %1051 = vmatmul.mubr.bf16.gmra.mxu0 %v495
    %v1052 = vpop.f32.mrf.mxu0
    %v1053 = vadd.f32 %v1012, %v1052
    %v1054 = vpop.f32.mrf.mxu0
    %v1055 = vadd.f32 %v1014, %v1054
    %v1056 = vpop.f32.mrf.mxu0
    %v1057 = vpop.f32.mrf.mxu0
    %1058 = vdwg.mxu0
    %1059 = vmatprep.subr.bf16.mxu0 0
    %1060 = vmatpush1.bf16.msra.mxu0 %v856
    %1061 = vmatprep.subr.bf16.mxu0 0
    %1062 = vmatpush1.bf16.msra.mxu0 %v853
    %1063 = vmatprep.subr.bf16.mxu0 0
    %1064 = vmatpush1.bf16.msra.mxu0 %v850
    %1065 = vmatprep.subr.bf16.mxu0 0
    %1066 = vmatpush1.bf16.msra.mxu0 %v847
    %1067 = vmatprep.subr.bf16.mxu0 0
    %1068 = vmatpush1.bf16.msra.mxu0 %v844
    %1069 = vmatprep.subr.bf16.mxu0 0
    %1070 = vmatpush1.bf16.msra.mxu0 %v841
    %1071 = vmatprep.subr.bf16.mxu0 0
    %1072 = vmatpush1.bf16.msra.mxu0 %v838
    %1073 = vmatprep.subr.bf16.mxu0 0
    %1074 = vmatpush1.bf16.msra.mxu0 %v835
    %1075 = vmatprep.subr.bf16.mxu0 0
    %1076 = vmatpush2.bf16.msra.mxu0 %v880
    %1077 = vmatprep.subr.bf16.mxu0 0
    %1078 = vmatpush2.bf16.msra.mxu0 %v877
    %1079 = vmatprep.subr.bf16.mxu0 0
    %1080 = vmatpush2.bf16.msra.mxu0 %v874
    %1081 = vmatprep.subr.bf16.mxu0 0
    %1082 = vmatpush2.bf16.msra.mxu0 %v871
    %1083 = vmatprep.subr.bf16.mxu0 0
    %1084 = vmatpush2.bf16.msra.mxu0 %v868
    %1085 = vmatprep.subr.bf16.mxu0 0
    %1086 = vmatpush2.bf16.msra.mxu0 %v865
    %1087 = vmatprep.subr.bf16.mxu0 0
    %1088 = vmatpush2.bf16.msra.mxu0 %v862
    %1089 = vmatprep.subr.bf16.mxu0 0
    %1090 = vmatpush2.bf16.msra.mxu0 %v859
    %1091 = vmatprep.mubr.bf16.mxu0 %v494
    %1092 = vmatmul.mubr.bf16.gmra.mxu0 %v493
    %v1093 = vpop.f32.mrf.mxu0
    %v1094 = vadd.f32 0.0, %v1093
    %v1095 = vpop.f32.mrf.mxu0
    %v1096 = vpop.f32.mrf.mxu0
    %v1097 = vpop.f32.mrf.mxu0
    %1098 = vdwg.mxu0
    %1099 = vmatprep.subr.bf16.mxu0 0
    %1100 = vmatpush1.bf16.msra.mxu0 %v904
    %1101 = vmatprep.subr.bf16.mxu0 0
    %1102 = vmatpush1.bf16.msra.mxu0 %v901
    %1103 = vmatprep.subr.bf16.mxu0 0
    %1104 = vmatpush1.bf16.msra.mxu0 %v898
    %1105 = vmatprep.subr.bf16.mxu0 0
    %1106 = vmatpush1.bf16.msra.mxu0 %v895
    %1107 = vmatprep.subr.bf16.mxu0 0
    %1108 = vmatpush1.bf16.msra.mxu0 %v892
    %1109 = vmatprep.subr.bf16.mxu0 0
    %1110 = vmatpush1.bf16.msra.mxu0 %v889
    %1111 = vmatprep.subr.bf16.mxu0 0
    %1112 = vmatpush1.bf16.msra.mxu0 %v886
    %1113 = vmatprep.subr.bf16.mxu0 0
    %1114 = vmatpush1.bf16.msra.mxu0 %v883
    %1115 = vmatprep.subr.bf16.mxu0 0
    %1116 = vmatpush2.bf16.msra.mxu0 0
    %1117 = vmatprep.subr.bf16.mxu0 0
    %1118 = vmatpush2.bf16.msra.mxu0 0
    %1119 = vmatprep.subr.bf16.mxu0 0
    %1120 = vmatpush2.bf16.msra.mxu0 0
    %1121 = vmatprep.subr.bf16.mxu0 0
    %1122 = vmatpush2.bf16.msra.mxu0 0
    %1123 = vmatprep.subr.bf16.mxu0 0
    %1124 = vmatpush2.bf16.msra.mxu0 0
    %1125 = vmatprep.subr.bf16.mxu0 0
    %1126 = vmatpush2.bf16.msra.mxu0 0
    %1127 = vmatprep.subr.bf16.mxu0 0
    %1128 = vmatpush2.bf16.msra.mxu0 0
    %1129 = vmatprep.subr.bf16.mxu0 0
    %1130 = vmatpush2.bf16.msra.mxu0 0
    %1131 = vmatprep.mubr.bf16.mxu0 0
    %1132 = vmatmul.mubr.bf16.gmra.mxu0 %v495
    %v1133 = vpop.f32.mrf.mxu0
    %v1134 = vadd.f32 %v1094, %v1133
    %v1135 = vpop.f32.mrf.mxu0
    %v1136 = vpop.f32.mrf.mxu0
    %v1137 = vpop.f32.mrf.mxu0
    %1138 = vdwg.mxu0
    %v1235 = vunpack.c.l.b16 %v385
    %v1236 = vunpack.c.h.b16 %v385
    %v1237 = vunpack.c.l.b16 %v386
    %v1238 = vunpack.c.l.b16 %v387
    %v1239 = vunpack.c.h.b16 %v387
    %v1240 = vunpack.c.l.b16 %v388
    %v1241 = vunpack.c.l.b16 %v389
    %v1242 = vunpack.c.h.b16 %v389
    %v1243 = vunpack.c.l.b16 %v390
    %v1244 = vunpack.c.l.b16 %v391
    %v1245 = vunpack.c.h.b16 %v391
    %v1246 = vunpack.c.l.b16 %v392
    %v1247 = vunpack.c.l.b16 %v393
    %v1248 = vunpack.c.h.b16 %v393
    %v1249 = vunpack.c.l.b16 %v394
    %v1250 = vunpack.c.l.b16 %v395
    %v1251 = vunpack.c.h.b16 %v395
    %v1252 = vunpack.c.l.b16 %v396
    %v1253 = vunpack.c.l.b16 %v397
    %v1254 = vunpack.c.h.b16 %v397
    %v1255 = vunpack.c.l.b16 %v398
    %v1256 = vunpack.c.l.b16 %v399
    %v1257 = vunpack.c.h.b16 %v399
    %v1258 = vunpack.c.l.b16 %v400
    %v1259 = vunpack.c.l.b16 %v401
    %v1260 = vunpack.c.h.b16 %v401
    %v1261 = vunpack.c.l.b16 %v402
    %v1262 = vunpack.c.l.b16 %v403
    %v1263 = vunpack.c.h.b16 %v403
    %v1264 = vunpack.c.l.b16 %v404
    %v1265 = vunpack.c.l.b16 %v405
    %v1266 = vunpack.c.h.b16 %v405
    %v1267 = vunpack.c.l.b16 %v406
    %v1268 = vunpack.c.l.b16 %v407
    %v1269 = vunpack.c.h.b16 %v407
    %v1270 = vunpack.c.l.b16 %v408
    %v1271 = vunpack.c.l.b16 %v409
    %v1272 = vunpack.c.h.b16 %v409
    %v1273 = vunpack.c.l.b16 %v410
    %v1274 = vunpack.c.l.b16 %v411
    %v1275 = vunpack.c.h.b16 %v411
    %v1276 = vunpack.c.l.b16 %v412
    %v1277 = vunpack.c.l.b16 %v413
    %v1278 = vunpack.c.h.b16 %v413
    %v1279 = vunpack.c.l.b16 %v414
    %v1280 = vunpack.c.l.b16 %v415
    %v1281 = vunpack.c.h.b16 %v415
    %v1282 = vunpack.c.l.b16 %v416
    %v1283 = vunpack.c.l.b16 %v417
    %v1284 = vunpack.c.h.b16 %v417
    %v1285 = vunpack.c.l.b16 %v418
    %v1286 = vunpack.c.l.b16 %v419
    %v1287 = vunpack.c.h.b16 %v419
    %v1288 = vunpack.c.l.b16 %v420
    %v1289 = vunpack.c.l.b16 %v421
    %v1290 = vunpack.c.h.b16 %v421
    %v1291 = vunpack.c.l.b16 %v422
    %v1292 = vunpack.c.l.b16 %v423
    %v1293 = vunpack.c.h.b16 %v423
    %v1294 = vunpack.c.l.b16 %v424
    %v1295 = vunpack.c.l.b16 %v425
    %v1296 = vunpack.c.h.b16 %v425
    %v1297 = vunpack.c.l.b16 %v426
    %v1298 = vunpack.c.l.b16 %v427
    %v1299 = vunpack.c.h.b16 %v427
    %v1300 = vunpack.c.l.b16 %v428
    %v1301 = vunpack.c.l.b16 %v429
    %v1302 = vunpack.c.h.b16 %v429
    %v1303 = vunpack.c.l.b16 %v430
    %v1304 = vunpack.c.l.b16 %v431
    %v1305 = vunpack.c.h.b16 %v431
    %v1306 = vunpack.c.l.b16 %v432
    %v1307 = vunpack.c.l.b16 %v433
    %v1308 = vunpack.c.h.b16 %v433
    %v1309 = vunpack.c.l.b16 %v434
    %v1310 = vunpack.c.l.b16 %v435
    %v1311 = vunpack.c.h.b16 %v435
    %v1312 = vunpack.c.l.b16 %v436
    %v1313 = vunpack.c.l.b16 %v437
    %v1314 = vunpack.c.h.b16 %v437
    %v1315 = vunpack.c.l.b16 %v438
    %v1316 = vunpack.c.l.b16 %v439
    %v1317 = vunpack.c.h.b16 %v439
    %v1318 = vunpack.c.l.b16 %v440
    %v1319 = vunpack.c.l.b16 %v441
    %v1320 = vunpack.c.h.b16 %v441
    %v1321 = vunpack.c.l.b16 %v442
    %v1322 = vunpack.c.l.b16 %v443
    %v1323 = vunpack.c.h.b16 %v443
    %v1324 = vunpack.c.l.b16 %v444
    %v1325 = vunpack.c.l.b16 %v445
    %v1326 = vunpack.c.h.b16 %v445
    %v1327 = vunpack.c.l.b16 %v446
    %v1328 = vunpack.c.l.b16 %v447
    %v1329 = vunpack.c.h.b16 %v447
    %v1330 = vunpack.c.l.b16 %v448
    %v1331 = vunpack.c.l.b16 %v449
    %v1332 = vunpack.c.h.b16 %v449
    %v1333 = vunpack.c.l.b16 %v450
    %v1334 = vunpack.c.l.b16 %v451
    %v1335 = vunpack.c.h.b16 %v451
    %v1336 = vunpack.c.l.b16 %v452
    %v1337 = vunpack.c.l.b16 %v453
    %v1338 = vunpack.c.h.b16 %v453
    %v1339 = vunpack.c.l.b16 %v454
    %v1340 = vunpack.c.l.b16 %v455
    %v1341 = vunpack.c.h.b16 %v455
    %v1342 = vunpack.c.l.b16 %v456
    %v1343 = vunpack.c.l.b16 %v457
    %v1344 = vunpack.c.h.b16 %v457
    %v1345 = vunpack.c.l.b16 %v458
    %v1346 = vunpack.c.l.b16 %v459
    %v1347 = vunpack.c.h.b16 %v459
    %v1348 = vunpack.c.l.b16 %v460
    %v1349 = vunpack.c.l.b16 %v461
    %v1350 = vunpack.c.h.b16 %v461
    %v1351 = vunpack.c.l.b16 %v462
    %v1352 = vunpack.c.l.b16 %v463
    %v1353 = vunpack.c.h.b16 %v463
    %v1354 = vunpack.c.l.b16 %v464
    %v1355 = vunpack.c.l.b16 %v465
    %v1356 = vunpack.c.h.b16 %v465
    %v1357 = vunpack.c.l.b16 %v466
    %v1358 = vunpack.c.l.b16 %v467
    %v1359 = vunpack.c.h.b16 %v467
    %v1360 = vunpack.c.l.b16 %v468
    %v1361 = vunpack.c.l.b16 %v469
    %v1362 = vunpack.c.h.b16 %v469
    %v1363 = vunpack.c.l.b16 %v470
    %v1364 = vunpack.c.l.b16 %v471
    %v1365 = vunpack.c.h.b16 %v471
    %v1366 = vunpack.c.l.b16 %v472
    %v1367 = vunpack.c.l.b16 %v473
    %v1368 = vunpack.c.h.b16 %v473
    %v1369 = vunpack.c.l.b16 %v474
    %v1370 = vunpack.c.l.b16 %v475
    %v1371 = vunpack.c.h.b16 %v475
    %v1372 = vunpack.c.l.b16 %v476
    %v1373 = vunpack.c.l.b16 %v477
    %v1374 = vunpack.c.h.b16 %v477
    %v1375 = vunpack.c.l.b16 %v478
    %v1376 = vunpack.c.l.b16 %v479
    %v1377 = vunpack.c.h.b16 %v479
    %v1378 = vunpack.c.l.b16 %v480
    %v1379 = vpack.c.b16 %v1238, %v1235
    %v1380 = vpack.c.b16 %v1239, %v1236
    %v1381 = vpack.c.b16 %v1240, %v1237
    %v1382 = vpack.c.b16 %v1244, %v1241
    %v1383 = vpack.c.b16 %v1245, %v1242
    %v1384 = vpack.c.b16 %v1246, %v1243
    %v1385 = vpack.c.b16 %v1250, %v1247
    %v1386 = vpack.c.b16 %v1251, %v1248
    %v1387 = vpack.c.b16 %v1252, %v1249
    %v1388 = vpack.c.b16 %v1256, %v1253
    %v1389 = vpack.c.b16 %v1257, %v1254
    %v1390 = vpack.c.b16 %v1258, %v1255
    %v1391 = vpack.c.b16 %v1262, %v1259
    %v1392 = vpack.c.b16 %v1263, %v1260
    %v1393 = vpack.c.b16 %v1264, %v1261
    %v1394 = vpack.c.b16 %v1268, %v1265
    %v1395 = vpack.c.b16 %v1269, %v1266
    %v1396 = vpack.c.b16 %v1270, %v1267
    %v1397 = vpack.c.b16 %v1274, %v1271
    %v1398 = vpack.c.b16 %v1275, %v1272
    %v1399 = vpack.c.b16 %v1276, %v1273
    %v1400 = vpack.c.b16 %v1280, %v1277
    %v1401 = vpack.c.b16 %v1281, %v1278
    %v1402 = vpack.c.b16 %v1282, %v1279
    %v1403 = vpack.c.b16 %v1286, %v1283
    %v1404 = vpack.c.b16 %v1287, %v1284
    %v1405 = vpack.c.b16 %v1288, %v1285
    %v1406 = vpack.c.b16 %v1292, %v1289
    %v1407 = vpack.c.b16 %v1293, %v1290
    %v1408 = vpack.c.b16 %v1294, %v1291
    %v1409 = vpack.c.b16 %v1298, %v1295
    %v1410 = vpack.c.b16 %v1299, %v1296
    %v1411 = vpack.c.b16 %v1300, %v1297
    %v1412 = vpack.c.b16 %v1304, %v1301
    %v1413 = vpack.c.b16 %v1305, %v1302
    %v1414 = vpack.c.b16 %v1306, %v1303
    %v1415 = vpack.c.b16 %v1310, %v1307
    %v1416 = vpack.c.b16 %v1311, %v1308
    %v1417 = vpack.c.b16 %v1312, %v1309
    %v1418 = vpack.c.b16 %v1316, %v1313
    %v1419 = vpack.c.b16 %v1317, %v1314
    %v1420 = vpack.c.b16 %v1318, %v1315
    %v1421 = vpack.c.b16 %v1322, %v1319
    %v1422 = vpack.c.b16 %v1323, %v1320
    %v1423 = vpack.c.b16 %v1324, %v1321
    %v1424 = vpack.c.b16 %v1328, %v1325
    %v1425 = vpack.c.b16 %v1329, %v1326
    %v1426 = vpack.c.b16 %v1330, %v1327
    %v1427 = vpack.c.b16 %v1334, %v1331
    %v1428 = vpack.c.b16 %v1335, %v1332
    %v1429 = vpack.c.b16 %v1336, %v1333
    %v1430 = vpack.c.b16 %v1340, %v1337
    %v1431 = vpack.c.b16 %v1341, %v1338
    %v1432 = vpack.c.b16 %v1342, %v1339
    %v1433 = vpack.c.b16 %v1346, %v1343
    %v1434 = vpack.c.b16 %v1347, %v1344
    %v1435 = vpack.c.b16 %v1348, %v1345
    %v1436 = vpack.c.b16 %v1352, %v1349
    %v1437 = vpack.c.b16 %v1353, %v1350
    %v1438 = vpack.c.b16 %v1354, %v1351
    %v1439 = vpack.c.b16 %v1358, %v1355
    %v1440 = vpack.c.b16 %v1359, %v1356
    %v1441 = vpack.c.b16 %v1360, %v1357
    %v1442 = vpack.c.b16 %v1364, %v1361
    %v1443 = vpack.c.b16 %v1365, %v1362
    %v1444 = vpack.c.b16 %v1366, %v1363
    %v1445 = vpack.c.b16 %v1370, %v1367
    %v1446 = vpack.c.b16 %v1371, %v1368
    %v1447 = vpack.c.b16 %v1372, %v1369
    %v1448 = vpack.c.b16 %v1376, %v1373
    %v1449 = vpack.c.b16 %v1377, %v1374
    %v1450 = vpack.c.b16 %v1378, %v1375
    %1523 = vmatprep.subr.bf16.mxu0 %v1401
    %1524 = vmatpush1.bf16.msra.mxu0 %v1400
    %1525 = vmatprep.subr.bf16.mxu0 %v1398
    %1526 = vmatpush1.bf16.msra.mxu0 %v1397
    %1527 = vmatprep.subr.bf16.mxu0 %v1395
    %1528 = vmatpush1.bf16.msra.mxu0 %v1394
    %1529 = vmatprep.subr.bf16.mxu0 %v1392
    %1530 = vmatpush1.bf16.msra.mxu0 %v1391
    %1531 = vmatprep.subr.bf16.mxu0 %v1389
    %1532 = vmatpush1.bf16.msra.mxu0 %v1388
    %1533 = vmatprep.subr.bf16.mxu0 %v1386
    %1534 = vmatpush1.bf16.msra.mxu0 %v1385
    %1535 = vmatprep.subr.bf16.mxu0 %v1383
    %1536 = vmatpush1.bf16.msra.mxu0 %v1382
    %1537 = vmatprep.subr.bf16.mxu0 %v1380
    %1538 = vmatpush1.bf16.msra.mxu0 %v1379
    %1539 = vmatprep.subr.bf16.mxu0 %v1425
    %1540 = vmatpush2.bf16.msra.mxu0 %v1424
    %1541 = vmatprep.subr.bf16.mxu0 %v1422
    %1542 = vmatpush2.bf16.msra.mxu0 %v1421
    %1543 = vmatprep.subr.bf16.mxu0 %v1419
    %1544 = vmatpush2.bf16.msra.mxu0 %v1418
    %1545 = vmatprep.subr.bf16.mxu0 %v1416
    %1546 = vmatpush2.bf16.msra.mxu0 %v1415
    %1547 = vmatprep.subr.bf16.mxu0 %v1413
    %1548 = vmatpush2.bf16.msra.mxu0 %v1412
    %1549 = vmatprep.subr.bf16.mxu0 %v1410
    %1550 = vmatpush2.bf16.msra.mxu0 %v1409
    %1551 = vmatprep.subr.bf16.mxu0 %v1407
    %1552 = vmatpush2.bf16.msra.mxu0 %v1406
    %1553 = vmatprep.subr.bf16.mxu0 %v1404
    %1554 = vmatpush2.bf16.msra.mxu0 %v1403
    %1555 = vmatprep.mubr.bf16.mxu0 %v383
    %1556 = vmatmul.mubr.bf16.gmra.mxu0 %v382
    %v1557 = vpop.f32.mrf.mxu0
    %v1558 = vadd.f32 %v1053, %v1557
    %v1559 = vpop.f32.mrf.mxu0
    %v1560 = vadd.f32 %v1055, %v1559
    %v1561 = vpop.f32.mrf.mxu0
    %v1562 = vpop.f32.mrf.mxu0
    %1563 = vdwg.mxu0
    %1564 = vmatprep.subr.bf16.mxu0 %v1449
    %1565 = vmatpush1.bf16.msra.mxu0 %v1448
    %1566 = vmatprep.subr.bf16.mxu0 %v1446
    %1567 = vmatpush1.bf16.msra.mxu0 %v1445
    %1568 = vmatprep.subr.bf16.mxu0 %v1443
    %1569 = vmatpush1.bf16.msra.mxu0 %v1442
    %1570 = vmatprep.subr.bf16.mxu0 %v1440
    %1571 = vmatpush1.bf16.msra.mxu0 %v1439
    %1572 = vmatprep.subr.bf16.mxu0 %v1437
    %1573 = vmatpush1.bf16.msra.mxu0 %v1436
    %1574 = vmatprep.subr.bf16.mxu0 %v1434
    %1575 = vmatpush1.bf16.msra.mxu0 %v1433
    %1576 = vmatprep.subr.bf16.mxu0 %v1431
    %1577 = vmatpush1.bf16.msra.mxu0 %v1430
    %1578 = vmatprep.subr.bf16.mxu0 %v1428
    %1579 = vmatpush1.bf16.msra.mxu0 %v1427
    %1580 = vmatprep.subr.bf16.mxu0 0
    %1581 = vmatpush2.bf16.msra.mxu0 0
    %1582 = vmatprep.subr.bf16.mxu0 0
    %1583 = vmatpush2.bf16.msra.mxu0 0
    %1584 = vmatprep.subr.bf16.mxu0 0
    %1585 = vmatpush2.bf16.msra.mxu0 0
    %1586 = vmatprep.subr.bf16.mxu0 0
    %1587 = vmatpush2.bf16.msra.mxu0 0
    %1588 = vmatprep.subr.bf16.mxu0 0
    %1589 = vmatpush2.bf16.msra.mxu0 0
    %1590 = vmatprep.subr.bf16.mxu0 0
    %1591 = vmatpush2.bf16.msra.mxu0 0
    %1592 = vmatprep.subr.bf16.mxu0 0
    %1593 = vmatpush2.bf16.msra.mxu0 0
    %1594 = vmatprep.subr.bf16.mxu0 0
    %1595 = vmatpush2.bf16.msra.mxu0 0
    %1596 = vmatprep.mubr.bf16.mxu0 0
    %1597 = vmatmul.mubr.bf16.gmra.mxu0 %v384
    %v1598 = vpop.f32.mrf.mxu0
    %v1599 = vadd.f32 %v1558, %v1598
    %v1600 = vpop.f32.mrf.mxu0
    %v1601 = vadd.f32 %v1560, %v1600
    %v1602 = vpop.f32.mrf.mxu0
    %v1603 = vpop.f32.mrf.mxu0
    %1604 = vdwg.mxu0
    %1605 = vmatprep.subr.bf16.mxu0 0
    %1606 = vmatpush1.bf16.msra.mxu0 %v1402
    %1607 = vmatprep.subr.bf16.mxu0 0
    %1608 = vmatpush1.bf16.msra.mxu0 %v1399
    %1609 = vmatprep.subr.bf16.mxu0 0
    %1610 = vmatpush1.bf16.msra.mxu0 %v1396
    %1611 = vmatprep.subr.bf16.mxu0 0
    %1612 = vmatpush1.bf16.msra.mxu0 %v1393
    %1613 = vmatprep.subr.bf16.mxu0 0
    %1614 = vmatpush1.bf16.msra.mxu0 %v1390
    %1615 = vmatprep.subr.bf16.mxu0 0
    %1616 = vmatpush1.bf16.msra.mxu0 %v1387
    %1617 = vmatprep.subr.bf16.mxu0 0
    %1618 = vmatpush1.bf16.msra.mxu0 %v1384
    %1619 = vmatprep.subr.bf16.mxu0 0
    %1620 = vmatpush1.bf16.msra.mxu0 %v1381
    %1621 = vmatprep.subr.bf16.mxu0 0
    %1622 = vmatpush2.bf16.msra.mxu0 %v1426
    %1623 = vmatprep.subr.bf16.mxu0 0
    %1624 = vmatpush2.bf16.msra.mxu0 %v1423
    %1625 = vmatprep.subr.bf16.mxu0 0
    %1626 = vmatpush2.bf16.msra.mxu0 %v1420
    %1627 = vmatprep.subr.bf16.mxu0 0
    %1628 = vmatpush2.bf16.msra.mxu0 %v1417
    %1629 = vmatprep.subr.bf16.mxu0 0
    %1630 = vmatpush2.bf16.msra.mxu0 %v1414
    %1631 = vmatprep.subr.bf16.mxu0 0
    %1632 = vmatpush2.bf16.msra.mxu0 %v1411
    %1633 = vmatprep.subr.bf16.mxu0 0
    %1634 = vmatpush2.bf16.msra.mxu0 %v1408
    %1635 = vmatprep.subr.bf16.mxu0 0
    %1636 = vmatpush2.bf16.msra.mxu0 %v1405
    %1637 = vmatprep.mubr.bf16.mxu0 %v383
    %1638 = vmatmul.mubr.bf16.gmra.mxu0 %v382
    %v1639 = vpop.f32.mrf.mxu0
    %v1640 = vadd.f32 %v1134, %v1639
    %v1641 = vpop.f32.mrf.mxu0
    %v1642 = vpop.f32.mrf.mxu0
    %v1643 = vpop.f32.mrf.mxu0
    %1644 = vdwg.mxu0
    %1645 = vmatprep.subr.bf16.mxu0 0
    %1646 = vmatpush1.bf16.msra.mxu0 %v1450
    %1647 = vmatprep.subr.bf16.mxu0 0
    %1648 = vmatpush1.bf16.msra.mxu0 %v1447
    %1649 = vmatprep.subr.bf16.mxu0 0
    %1650 = vmatpush1.bf16.msra.mxu0 %v1444
    %1651 = vmatprep.subr.bf16.mxu0 0
    %1652 = vmatpush1.bf16.msra.mxu0 %v1441
    %1653 = vmatprep.subr.bf16.mxu0 0
    %1654 = vmatpush1.bf16.msra.mxu0 %v1438
    %1655 = vmatprep.subr.bf16.mxu0 0
    %1656 = vmatpush1.bf16.msra.mxu0 %v1435
    %1657 = vmatprep.subr.bf16.mxu0 0
    %1658 = vmatpush1.bf16.msra.mxu0 %v1432
    %1659 = vmatprep.subr.bf16.mxu0 0
    %1660 = vmatpush1.bf16.msra.mxu0 %v1429
    %1661 = vmatprep.subr.bf16.mxu0 0
    %1662 = vmatpush2.bf16.msra.mxu0 0
    %1663 = vmatprep.subr.bf16.mxu0 0
    %1664 = vmatpush2.bf16.msra.mxu0 0
    %1665 = vmatprep.subr.bf16.mxu0 0
    %1666 = vmatpush2.bf16.msra.mxu0 0
    %1667 = vmatprep.subr.bf16.mxu0 0
    %1668 = vmatpush2.bf16.msra.mxu0 0
    %1669 = vmatprep.subr.bf16.mxu0 0
    %1670 = vmatpush2.bf16.msra.mxu0 0
    %1671 = vmatprep.subr.bf16.mxu0 0
    %1672 = vmatpush2.bf16.msra.mxu0 0
    %1673 = vmatprep.subr.bf16.mxu0 0
    %1674 = vmatpush2.bf16.msra.mxu0 0
    %1675 = vmatprep.subr.bf16.mxu0 0
    %1676 = vmatpush2.bf16.msra.mxu0 0
    %1677 = vmatprep.mubr.bf16.mxu0 0
    %1678 = vmatmul.mubr.bf16.gmra.mxu0 %v384
    %v1679 = vpop.f32.mrf.mxu0
    %v1680 = vadd.f32 %v1640, %v1679
    %v1681 = vpop.f32.mrf.mxu0
    %v1682 = vpop.f32.mrf.mxu0
    %v1683 = vpop.f32.mrf.mxu0
    %1684 = vdwg.mxu0
    %v1685 = vld [vmem:[%s5] sm:$0x7]
    %v1687 = vlaneseq
    %v1688 = vshrl.u32 %v1687, 7
    %v1689 = vsub.s32 0, %v1688
    %v1690 = vrot.slane %v1685, %v1689
    %v1691 = vlaneseq
    %v1692 = vshrl.u32 %v1691, 7
    %v1693 = vsub.s32 1, %v1692
    %v1694 = vrot.slane %v1685, %v1693
    %v1695 = vlaneseq
    %v1696 = vshrl.u32 %v1695, 7
    %v1697 = vsub.s32 2, %v1696
    %v1698 = vrot.slane %v1685, %v1697
    %v1702 = vadd.f32 %v1599, %v1690
    %v1703 = vadd.f32 %v1601, %v1694
    %v1704 = vadd.f32 %v1680, %v1698
    %v1708 = vcombine.low %v1702, %v1703
    %v1710 = vunpack.c.l.s4 1983009808
    %v1711 = vunpack.c.0.s8 %v1710
    %v1712 = vlaneseq
    %v1713 = vshrl.u32 %v1712, 7
    %v1714 = vsub.s32 %v1711, %v1713
    %v1715 = vrot.slane %v1708, %v1714
    %v1717 = vunpack.c.l.s4 1983009808
    %v1718 = vunpack.c.0.s8 %v1717
    %v1719 = vlaneseq
    %v1720 = vshrl.u32 %v1719, 7
    %v1721 = vsub.s32 %v1718, %v1720
    %v1722 = vrot.slane %v1704, %v1721
    %v1723 = vcombine.low %v1715, %v1722
    %1725 = vst [vmem:[#allocation2] sm:$0x3f] %v1723
    // Predicated region
    $region26: #{policy_head_forward.1} parent=1 // pred_check
      _
    $region27: #{policy_head_forward.1} parent=1 // pred_check_branch
      %1727 = sbr.rel (0) target = $region29
    $region28: #{policy_head_forward.1} parent=1 // pred_region
      %s1729 = ssub.s32 96, 96
      %1730 = vsyncadd [#allocation3], %s1729
      %s1732 = sshll.u32 [#allocation2], 4
      %s1733 = int_to_ptr.vmem [resolvable:$true] %s1732
      %1735 = dma.vmem_to_hbm [thread:$0]  %s1733, 96, %s6, [#allocation3]
    $region29: #{policy_head_forward.1} parent=1 // pred_fallthru
      _
    // Predicated region
    $region30: #{policy_head_forward.1} parent=1 // pred_check
      _
    $region31: #{policy_head_forward.1} parent=1 // pred_check_branch
      %1737 = sbr.rel (0) target = $region33
    $region32: #{policy_head_forward.1} parent=1 // pred_region
      %1738 = dma.done [#allocation3], 96
    $region33: #{policy_head_forward.1} parent=1 // pred_fallthru
      _
    %1739 = vsyncpa [#allocation3], 1

</llo_original>
